<compile_context>
chip_gen: v7x
topology: tpu7x:2x2x1
jax: 0.10.0
libtpu: 0.0.40
codegen_flags: <defaults>
</compile_context>

<pallas_src>
import functools
import math

import jax
import jax.numpy as jnp
from jax import lax
from jax.experimental import pallas as pl
from jax.experimental.pallas import tpu as pltpu


def _encoder_layer_kernel(
    # inputs
    x_ref,
    wq_ref, wqkv_ref, bqkv_ref,
    w_op_ref, w_l2_ref, b_l2_ref,
    w_fc_ref,
    w_fc2_ref, b_fc2_ref, w_fc1_ref, b_fc1_ref,
    ln1_w_ref, ln1_b_ref, ln2_w_ref, ln2_b_ref,
    # outputs
    o_ref,
    # scratch
    qkv_s, dx_s, attn_s,
    *, window_size, eps, compute_dtype, q_tile, approx_softmax,
):
    L = x_ref.shape[1]
    A = wq_ref.shape[1]             # dim_attn == hidden_size
    ng = len(window_size)
    hd = A // ng
    tq = q_tile
    num_qt = L // tq
    # PyTorch divides scores by sqrt(seq_len) (not head dim).  The "+ attn" on
    # unmasked entries from deformableAttn is folded into the scale (factor 2).
    scale2 = 2.0 / math.sqrt(L)

    def mm(a, b):
        # MXU matmul with compute_dtype operands and f32 accumulation.
        return jnp.dot(a.astype(compute_dtype), b.astype(compute_dtype),
                       preferred_element_type=jnp.float32)

    x = x_ref[0]                                              # (L, D) f32

    # --- Query projection (bias-free).  Kept in f32: it feeds the hard
    #     deformable-mask threshold below.  Key/Value projections omitted
    #     (dead code in the original module).
    q_in = jnp.dot(x, wq_ref[...], preferred_element_type=jnp.float32)  # (L, A)

    # --- fused qkv projection (bias=True) -> VMEM scratch (sliced per q-tile)
    qkv_s[...] = mm(q_in, wqkv_ref[...]) + bqkv_ref[...]      # (L, 3A)

    # --- learnedvector: dx = sigmoid(linear2(offset_predictor(relu(q_in)))) * L
    #     (tiny; kept f32 so mask decisions match the f32 math bit-for-bit).
    h_off = jnp.dot(jnp.maximum(q_in, 0.0), w_op_ref[...],
                    preferred_element_type=jnp.float32)        # (L, learneddim)
    off_logit = (jnp.sum(h_off * w_l2_ref[...], axis=-1, keepdims=True)
                 + b_l2_ref[...])                              # (L, 1)
    dx_s[...] = float(L) / (1.0 + jnp.exp(-off_logit))         # sigmoid * L

    # --- deformable windowed attention, tiled over query rows ---------------
    @pl.loop(0, num_qt)
    def _attend_q_tile(t):
        r0 = pl.multiple_of(t * tq, tq)
        row = (lax.broadcasted_iota(jnp.int32, (tq, L), 0) + r0).astype(jnp.float32)
        col = lax.broadcasted_iota(jnp.int32, (tq, L), 1).astype(jnp.float32)
        # (j - i) on/above the diagonal, 1e18 (always masked) below it.
        win_mask = jnp.where(col < row, 1e18, col - row)       # (tq, L)
        dx_t = dx_s[pl.ds(r0, tq), :]                          # (tq, 1)
        for g in range(ng):                                    # static, small
            # NOTE: at production sizes hd = A/len(window_size) should be a
            # multiple of 128 so these column slices are lane-aligned.
            qg = qkv_s[pl.ds(r0, tq), g * hd:(g + 1) * hd]             # (tq, hd)
            kg = qkv_s[:, A + g * hd:A + (g + 1) * hd]                 # (L, hd)
            vg = qkv_s[:, 2 * A + g * hd:2 * A + (g + 1) * hd]         # (L, hd)
            s = lax.dot_general(
                qg.astype(compute_dtype), kg.astype(compute_dtype),
                (((1,), (1,)), ((), ())),
                preferred_element_type=jnp.float32) * scale2           # (tq, L)
            dx = dx_t + float(window_size[g])                          # (tq, 1)
            # masked -> exp() == 0 exactly; unmasked -> 2*score (already scaled)
            masked = jnp.where(win_mask > dx, -1e30, s)
            m = jnp.max(masked, axis=-1, keepdims=True)
            e = jnp.exp(masked - m)
            denom = jnp.sum(e, axis=-1, keepdims=True)
            if approx_softmax:
                p = e * pl.reciprocal(denom, approx=True)      # EUP, frees VPU
            else:
                p = e / denom
            attn_s[pl.ds(r0, tq), g * hd:(g + 1) * hd] = mm(p, vg)     # (tq, hd)

    # --- output projection: ONE K=A matmul over the assembled attention -----
    a1 = mm(attn_s[...], w_fc_ref[...])                        # (L, E)

    # --- residual + LayerNorm 1
    h1 = x + a1
    mu1 = jnp.mean(h1, axis=-1, keepdims=True)
    var1 = jnp.mean(jnp.square(h1 - mu1), axis=-1, keepdims=True)
    x1 = (h1 - mu1) * lax.rsqrt(var1 + eps) * ln1_w_ref[...] + ln1_b_ref[...]

    # --- feed-forward: fc1(relu(fc2(x1)))  (both Linear layers have bias)
    h2 = jnp.maximum(mm(x1, w_fc2_ref[...]) + b_fc2_ref[...], 0.0)
    a2 = mm(h2, w_fc1_ref[...]) + b_fc1_ref[...]

    # --- residual + LayerNorm 2
    h3 = x1 + a2
    mu2 = jnp.mean(h3, axis=-1, keepdims=True)
    var2 = jnp.mean(jnp.square(h3 - mu2), axis=-1, keepdims=True)
    out = (h3 - mu2) * lax.rsqrt(var2 + eps) * ln2_w_ref[...] + ln2_b_ref[...]

    o_ref[0, :, :] = out.astype(o_ref.dtype)


def encoder_layer_forward(x, params, *, window_size, eps=1e-5,
                          compute_dtype=jnp.bfloat16, q_tile=256,
                          approx_softmax=True, vmem_limit_bytes=None):
    """Fused EncoderLayer forward.

    x: (B, L, dim_val) float32.
    params: weights stored pre-transposed as (in_features, out_features);
            biases / LayerNorm params as (1, features).
    """
    B, L, D = x.shape
    A = params["wq"].shape[1]
    E = params["w_fc"].shape[1]
    ld = params["w_op"].shape[1]
    ng = len(window_size)
    assert A % ng == 0, "hidden_size must be divisible by len(window_size)"
    assert E == D, "embedding_size must equal dim_val (residual add)"

    # Query-row tile: prefer 256 (v6e/v7x MXU-native), fall back to a divisor
    # of L for short sequences (toy demo: tq == L == 8).
    tq = min(q_tile, L)
    if L % tq:
        tq = math.gcd(L, tq)

    weights = (
        params["wq"], params["wqkv"], params["bqkv"],
        params["w_op"], params["w_l2"], params["b_l2"],
        params["w_fc"],
        params["w_fc2"], params["b_fc2"], params["w_fc1"], params["b_fc1"],
        params["ln1_w"], params["ln1_b"], params["ln2_w"], params["ln2_b"],
    )

    # Grid-invariant weights: whole array resident in VMEM, single-buffered.
    weight_spec = pl.BlockSpec(memory_space=pltpu.MemorySpace.VMEM)
    in_specs = ([pl.BlockSpec((1, L, D), lambda b: (b, 0, 0))]
                + [weight_spec] * len(weights))
    out_spec = pl.BlockSpec((1, L, D), lambda b: (b, 0, 0))

    scratch_shapes = [
        pltpu.VMEM((L, 3 * A), jnp.float32),   # fused q|k|v
        pltpu.VMEM((L, 1), jnp.float32),       # learned-offset base (dx)
        pltpu.VMEM((L, A), jnp.float32),       # attention output (pre out-proj)
    ]

    # --- explicit VMEM budget -> vmem_limit_bytes, clamped to physical VMEM.
    weight_bytes = sum(int(w.size) * w.dtype.itemsize for w in weights)
    io_bytes = 2 * 2 * L * D * x.dtype.itemsize            # x & out, 2-buffered
    scratch_bytes = 4 * (L * 3 * A + L + L * A)
    inter_bytes = 4 * (L * A + L * 3 * A + L * ld           # q_in / qkv / offset
                       + 6 * tq * L                          # score/exp/prob temps
                       + 6 * L * max(D, E))                  # LN / FFN temps
    budget = weight_bytes + io_bytes + scratch_bytes + inter_bytes
    if vmem_limit_bytes is None:
        try:
            phys = int(pltpu.get_tpu_info().vmem_capacity_bytes)
        except Exception:
            phys = 64 * 1024 * 1024      # conservative: v7x has 64 MiB per TC
        vmem_limit_bytes = min(max(int(1.5 * budget) + (4 << 20), 32 << 20), phys)

    # Advisory cost estimate (matmul FLOPs + softmax/sigmoid transcendentals).
    flops_per_b = (
        2 * L * D * A                    # Query projection
        + 2 * L * A * 3 * A              # fused qkv
        + 2 * L * A * ld + 2 * L * ld    # offset predictor + linear2
        + 4 * L * L * A                  # scores + p@v over all groups
        + 2 * L * A * E                  # output projection
        + 4 * L * D * D                  # FFN
    )
    cost = pl.CostEstimate(
        flops=int(B * flops_per_b),
        transcendentals=int(B * (ng * L * L + L)),
        bytes_accessed=int(x.size * x.dtype.itemsize + weight_bytes
                           + B * L * D * x.dtype.itemsize),
    )

    kernel = functools.partial(
        _encoder_layer_kernel,
        window_size=tuple(int(w) for w in window_size),
        eps=float(eps),
        compute_dtype=compute_dtype,
        q_tile=int(tq),
        approx_softmax=bool(approx_softmax),
    )

    return pl.pallas_call(
        kernel,
        out_shape=jax.ShapeDtypeStruct((B, L, D), x.dtype),
        grid_spec=pltpu.PrefetchScalarGridSpec(
            num_scalar_prefetch=0,
            grid=(B,),                   # batch >= 2 keeps both v7x TCs busy
            in_specs=in_specs,
            out_specs=out_spec,
            scratch_shapes=scratch_shapes,
        ),
        compiler_params=pltpu.CompilerParams(
            dimension_semantics=("parallel",),
            vmem_limit_bytes=int(vmem_limit_bytes),
        ),
        cost_estimate=cost,
    )(x, *weights)


# ----------------------------------------------------------------------------
# Plain-JAX reference (direct port of the PyTorch forward) and parameter init.
# ----------------------------------------------------------------------------
def init_params(key, *, dim_val, dim_attn, hidden_size, embedding_size,
                learneddim):
    """Weights stored pre-transposed as (in, out); biases/LN params as (1, N)."""
    def uniform(k, shape, fan_in):
        bound = 1.0 / math.sqrt(fan_in)
        return jax.random.uniform(k, shape, jnp.float32, -bound, bound)

    ks = jax.random.split(key, 11)
    p = {}
    p["wq"] = uniform(ks[0], (dim_val, dim_attn), dim_val)              # Query.fc1 (no bias)
    p["wqkv"] = uniform(ks[1], (hidden_size, 3 * hidden_size), hidden_size)
    p["bqkv"] = uniform(ks[2], (1, 3 * hidden_size), hidden_size)
    p["w_op"] = uniform(ks[3], (hidden_size, learneddim), hidden_size)  # offset_predictor (no bias)
    p["w_l2"] = uniform(ks[4], (1, learneddim), learneddim)             # _linear2 weight (1, ld)
    p["b_l2"] = uniform(ks[5], (1, 1), learneddim)
    p["w_fc"] = uniform(ks[6], (hidden_size, embedding_size), hidden_size)  # MHAB.fc (no bias)
    p["w_fc2"] = uniform(ks[7], (dim_val, dim_val), dim_val)
    p["b_fc2"] = uniform(ks[8], (1, dim_val), dim_val)
    p["w_fc1"] = uniform(ks[9], (dim_val, dim_val), dim_val)
    p["b_fc1"] = uniform(ks[10], (1, dim_val), dim_val)
    p["ln1_w"] = jnp.ones((1, dim_val), jnp.float32)
    p["ln1_b"] = jnp.zeros((1, dim_val), jnp.float32)
    p["ln2_w"] = jnp.ones((1, dim_val), jnp.float32)
    p["ln2_b"] = jnp.zeros((1, dim_val), jnp.float32)
    return p


def encoder_layer_reference(x, p, *, window_size, eps=1e-5):
    B, L, D = x.shape
    A = p["wq"].shape[1]
    ng = len(window_size)
    hd = A // ng

    q_in = x @ p["wq"]
    qkv = q_in @ p["wqkv"] + p["bqkv"]
    q, k, v = qkv[..., :A], qkv[..., A:2 * A], qkv[..., 2 * A:]

    h_off = jnp.maximum(q_in, 0.0) @ p["w_op"]
    off_logit = jnp.sum(h_off * p["w_l2"], axis=-1, keepdims=True) + p["b_l2"]
    dx_base = jax.nn.sigmoid(off_logit) * L                     # (B, L, 1)

    i_idx = jnp.arange(L, dtype=jnp.float32)[:, None]
    j_idx = jnp.arange(L, dtype=jnp.float32)[None, :]
    win_mask = jnp.where(j_idx < i_idx, 1e18, j_idx - i_idx)    # (L, L)

    outs = []
    for g in range(ng):
        sl = slice(g * hd, (g + 1) * hd)
        qg, kg, vg = q[..., sl], k[..., sl], v[..., sl]
        s = jnp.einsum("bld,bmd->blm", qg, kg) / math.sqrt(L)
        dx = dx_base + float(window_size[g])
        masked = jnp.where(win_mask[None, :, :] > dx, s - 1e18, 2.0 * s)
        pr = jax.nn.softmax(masked, axis=-1)
        outs.append(jnp.einsum("blm,bmd->bld", pr, vg))
    a1 = jnp.concatenate(outs, -1) @ p["w_fc"]

    def layer_norm(h, w, b):
        mu = h.mean(-1, keepdims=True)
        var = ((h - mu) ** 2).mean(-1, keepdims=True)
        return (h - mu) * jax.lax.rsqrt(var + eps) * w + b

    x1 = layer_norm(x + a1, p["ln1_w"], p["ln1_b"])
    h2 = jnp.maximum(x1 @ p["w_fc2"] + p["b_fc2"], 0.0)
    a2 = h2 @ p["w_fc1"] + p["b_fc1"]
    return layer_norm(x1 + a2, p["ln2_w"], p["ln2_b"])


if __name__ == "__main__":
    # Small, self-consistent shapes implied by the module:
    #   dim_attn == hidden_size (MHA.qkv consumes the Query projection)
    #   embedding_size == dim_val (residual add in EncoderLayer)
    # NOTE: toy shapes (L=8, D=32, hd=16) exercise correctness, not the
    # lane-aligned layouts a production config (D/A multiples of 128) would use.
    batch, seq = 2, 8
    dim_val = 32
    dim_attn = 32
    hidden_size = 32
    embedding_size = 32
    learneddim = 16
    window_size = (2, 4)     # two attention groups ("heads")

    root = jax.random.PRNGKey(0)
    k_x, k_p = jax.random.split(root)
    x = jax.random.normal(k_x, (batch, seq, dim_val), dtype=jnp.float32)
    params = init_params(
        k_p, dim_val=dim_val, dim_attn=dim_attn, hidden_size=hidden_size,
        embedding_size=embedding_size, learneddim=learneddim)

    # Default (fast) path: bf16 matmul operands + approx-reciprocal softmax.
    fwd_fast = jax.jit(functools.partial(encoder_layer_forward,
                                         window_size=window_size))
    y = fwd_fast(x, params)
    jax.block_until_ready(y)

    # Strict path: f32 operands + exact softmax divide (bit-faithful check).
    fwd_exact = jax.jit(functools.partial(
        encoder_layer_forward, window_size=window_size,
        compute_dtype=jnp.float32, approx_softmax=False))
    y_exact = fwd_exact(x, params)
    jax.block_until_ready(y_exact)

    y_ref = encoder_layer_reference(x, params, window_size=window_size)

    assert y.shape == (batch, seq, dim_val)
    err_exact = float(jnp.max(jnp.abs(y_exact - y_ref)))
    assert jnp.allclose(y_exact, y_ref, atol=5e-4, rtol=5e-4), err_exact
    err_fast = float(jnp.max(jnp.abs(y - y_ref)))
    assert jnp.allclose(y, y_ref, atol=6e-2, rtol=6e-2), err_fast

    print("KERNEL_OK")
</pallas_src>

<mosaic_0001>
module attributes {stable_mosaic.version = 11 : i64} {
  func.func @_encoder_layer_kernel(%arg0: i32, %arg1: memref<1x8x32xf32, #tpu.memory_space<vmem>>, %arg2: memref<32x32xf32, #tpu.memory_space<vmem>>, %arg3: memref<32x96xf32, #tpu.memory_space<vmem>>, %arg4: memref<1x96xf32, #tpu.memory_space<vmem>>, %arg5: memref<32x16xf32, #tpu.memory_space<vmem>>, %arg6: memref<1x16xf32, #tpu.memory_space<vmem>>, %arg7: memref<1x1xf32, #tpu.memory_space<vmem>>, %arg8: memref<32x32xf32, #tpu.memory_space<vmem>>, %arg9: memref<32x32xf32, #tpu.memory_space<vmem>>, %arg10: memref<1x32xf32, #tpu.memory_space<vmem>>, %arg11: memref<32x32xf32, #tpu.memory_space<vmem>>, %arg12: memref<1x32xf32, #tpu.memory_space<vmem>>, %arg13: memref<1x32xf32, #tpu.memory_space<vmem>>, %arg14: memref<1x32xf32, #tpu.memory_space<vmem>>, %arg15: memref<1x32xf32, #tpu.memory_space<vmem>>, %arg16: memref<1x32xf32, #tpu.memory_space<vmem>>, %arg17: memref<1x8x32xf32, #tpu.memory_space<vmem>>, %arg18: memref<8x96xf32, #tpu.memory_space<vmem>>, %arg19: memref<8x1xf32, #tpu.memory_space<vmem>>, %arg20: memref<8x32xf32, #tpu.memory_space<vmem>>) attributes {dimension_semantics = [#tpu.dimension_semantics<parallel>], iteration_bounds = array<i64: 2>, scalar_prefetch = 0 : i64, scratch_operands = 3 : i64, tpu.core_type = #tpu.core_type<tc>, window_params = [{transform_indices = @transform_0, window_bounds = array<i64: 1, 8, 32>}, {pipeline_mode = #tpu.pipeline_mode<synchronous>, transform_indices = @transform_1, window_bounds = array<i64: 32, 32>}, {pipeline_mode = #tpu.pipeline_mode<synchronous>, transform_indices = @transform_2, window_bounds = array<i64: 32, 96>}, {pipeline_mode = #tpu.pipeline_mode<synchronous>, transform_indices = @transform_3, window_bounds = array<i64: 1, 96>}, {pipeline_mode = #tpu.pipeline_mode<synchronous>, transform_indices = @transform_4, window_bounds = array<i64: 32, 16>}, {pipeline_mode = #tpu.pipeline_mode<synchronous>, transform_indices = @transform_5, window_bounds = array<i64: 1, 16>}, {pipeline_mode = #tpu.pipeline_mode<synchronous>, transform_indices = @transform_6, window_bounds = array<i64: 1, 1>}, {pipeline_mode = #tpu.pipeline_mode<synchronous>, transform_indices = @transform_7, window_bounds = array<i64: 32, 32>}, {pipeline_mode = #tpu.pipeline_mode<synchronous>, transform_indices = @transform_8, window_bounds = array<i64: 32, 32>}, {pipeline_mode = #tpu.pipeline_mode<synchronous>, transform_indices = @transform_9, window_bounds = array<i64: 1, 32>}, {pipeline_mode = #tpu.pipeline_mode<synchronous>, transform_indices = @transform_10, window_bounds = array<i64: 32, 32>}, {pipeline_mode = #tpu.pipeline_mode<synchronous>, transform_indices = @transform_11, window_bounds = array<i64: 1, 32>}, {pipeline_mode = #tpu.pipeline_mode<synchronous>, transform_indices = @transform_12, window_bounds = array<i64: 1, 32>}, {pipeline_mode = #tpu.pipeline_mode<synchronous>, transform_indices = @transform_13, window_bounds = array<i64: 1, 32>}, {pipeline_mode = #tpu.pipeline_mode<synchronous>, transform_indices = @transform_14, window_bounds = array<i64: 1, 32>}, {pipeline_mode = #tpu.pipeline_mode<synchronous>, transform_indices = @transform_15, window_bounds = array<i64: 1, 32>}, {transform_indices = @transform_16, window_bounds = array<i64: 1, 8, 32>}]} {
    %c0 = arith.constant 0 : index
    %c0_0 = arith.constant 0 : index
    %c0_1 = arith.constant 0 : index
    %0 = vector.load %arg1[%c0, %c0_0, %c0_1] : memref<1x8x32xf32, #tpu.memory_space<vmem>>, vector<1x8x32xf32>
    %1 = vector.shape_cast %0 : vector<1x8x32xf32> to vector<8x32xf32>
    %c0_2 = arith.constant 0 : index
    %c0_3 = arith.constant 0 : index
    %2 = vector.load %arg2[%c0_2, %c0_3] : memref<32x32xf32, #tpu.memory_space<vmem>>, vector<32x32xf32>
    %cst = arith.constant dense<0.000000e+00> : vector<8x32xf32>
    %3 = tpu.matmul %1, %2, %cst {dimension_numbers = #tpu.dot_dimension_numbers<[1], [0], [0], [1], [0, 0, 1, 1], [], []>} : vector<8x32xf32>, vector<32x32xf32>, vector<8x32xf32> -> vector<8x32xf32>
    %c0_4 = arith.constant 0 : index
    %c0_5 = arith.constant 0 : index
    %4 = vector.load %arg3[%c0_4, %c0_5] : memref<32x96xf32, #tpu.memory_space<vmem>>, vector<32x96xf32>
    %5 = arith.truncf %3 : vector<8x32xf32> to vector<8x32xbf16>
    %6 = arith.truncf %4 : vector<32x96xf32> to vector<32x96xbf16>
    %cst_6 = arith.constant dense<0.000000e+00> : vector<8x96xf32>
    %7 = tpu.matmul %5, %6, %cst_6 {dimension_numbers = #tpu.dot_dimension_numbers<[1], [0], [0], [1], [0, 0, 1, 1], [], []>} : vector<8x32xbf16>, vector<32x96xbf16>, vector<8x96xf32> -> vector<8x96xf32>
    %c0_7 = arith.constant 0 : index
    %c0_8 = arith.constant 0 : index
    %8 = vector.load %arg4[%c0_7, %c0_8] : memref<1x96xf32, #tpu.memory_space<vmem>>, vector<1x96xf32>
    %9 = vector.broadcast %8 : vector<1x96xf32> to vector<8x96xf32>
    %10 = arith.addf %7, %9 : vector<8x96xf32>
    %c0_9 = arith.constant 0 : index
    %c0_10 = arith.constant 0 : index
    %11 = vector.load %arg18[%c0_9, %c0_10] : memref<8x96xf32, #tpu.memory_space<vmem>>, vector<8x96xf32>
    tpu.vector_store %arg18[%c0_9, %c0_10], %10 {strides = array<i32>} : memref<8x96xf32, #tpu.memory_space<vmem>>, vector<8x96xf32>,
    %cst_11 = arith.constant 0.000000e+00 : f32
    %12 = vector.broadcast %cst_11 : f32 to vector<8x32xf32>
    %13 = arith.maximumf %3, %12 : vector<8x32xf32>
    %c0_12 = arith.constant 0 : index
    %c0_13 = arith.constant 0 : index
    %14 = vector.load %arg5[%c0_12, %c0_13] : memref<32x16xf32, #tpu.memory_space<vmem>>, vector<32x16xf32>
    %cst_14 = arith.constant dense<0.000000e+00> : vector<8x16xf32>
    %15 = tpu.matmul %13, %14, %cst_14 {dimension_numbers = #tpu.dot_dimension_numbers<[1], [0], [0], [1], [0, 0, 1, 1], [], []>} : vector<8x32xf32>, vector<32x16xf32>, vector<8x16xf32> -> vector<8x16xf32>
    %c0_15 = arith.constant 0 : index
    %c0_16 = arith.constant 0 : index
    %16 = vector.load %arg6[%c0_15, %c0_16] : memref<1x16xf32, #tpu.memory_space<vmem>>, vector<1x16xf32>
    %17 = vector.broadcast %16 : vector<1x16xf32> to vector<8x16xf32>
    %18 = arith.mulf %15, %17 : vector<8x16xf32>
    %cst_17 = arith.constant dense<0.000000e+00> : vector<8xf32>
    %19 = vector.multi_reduction <add>, %18, %cst_17 [1] : vector<8x16xf32> to vector<8xf32>
    %20 = vector.shape_cast %19 : vector<8xf32> to vector<8x1xf32>
    %c0_18 = arith.constant 0 : index
    %c0_19 = arith.constant 0 : index
    %21 = vector.load %arg7[%c0_18, %c0_19] : memref<1x1xf32, #tpu.memory_space<vmem>>, vector<1x1xf32>
    %22 = vector.broadcast %21 : vector<1x1xf32> to vector<8x1xf32>
    %23 = arith.addf %20, %22 : vector<8x1xf32>
    %cst_20 = arith.constant 0.000000e+00 : f32
    %24 = vector.broadcast %cst_20 : f32 to vector<8x1xf32>
    %25 = arith.subf %24, %23 : vector<8x1xf32>
    %26 = math.exp %25 : vector<8x1xf32>
    %cst_21 = arith.constant 1.000000e+00 : f32
    %27 = vector.broadcast %cst_21 : f32 to vector<8x1xf32>
    %28 = arith.addf %27, %26 : vector<8x1xf32>
    %cst_22 = arith.constant 8.000000e+00 : f32
    %29 = vector.broadcast %cst_22 : f32 to vector<8x1xf32>
    %30 = arith.divf %29, %28 : vector<8x1xf32>
    %c0_23 = arith.constant 0 : index
    %c0_24 = arith.constant 0 : index
    %31 = vector.load %arg19[%c0_23, %c0_24] : memref<8x1xf32, #tpu.memory_space<vmem>>, vector<8x1xf32>
    tpu.vector_store %arg19[%c0_23, %c0_24], %30 {strides = array<i32>} : memref<8x1xf32, #tpu.memory_space<vmem>>, vector<8x1xf32>,
    %c0_i32 = arith.constant 0 : i32
    %c1_i32 = arith.constant 1 : i32
    %32 = arith.muli %c0_i32, %c1_i32 : i32
    %c0_i32_25 = arith.constant 0 : i32
    %33 = arith.addi %c0_i32_25, %32 : i32
    %c8_i32 = arith.constant 8 : i32
    %34 = arith.muli %33, %c8_i32 : i32
    %35 = tpu.assume_multiple %34, 8 : i32
    %36 = tpu.iota {dimensions = array<i32: 0>} : vector<8x8xi32>
    %37 = vector.broadcast %35 : i32 to vector<8x8xi32>
    %38 = arith.addi %36, %37 : vector<8x8xi32>
    %39 = arith.sitofp %38 : vector<8x8xi32> to vector<8x8xf32>
    %40 = tpu.iota {dimensions = array<i32: 1>} : vector<8x8xi32>
    %41 = arith.sitofp %40 : vector<8x8xi32> to vector<8x8xf32>
    %42 = arith.cmpf olt, %41, %39 : vector<8x8xf32>
    %43 = arith.subf %41, %39 : vector<8x8xf32>
    %cst_26 = arith.constant 9.99999984E+17 : f32
    %44 = vector.broadcast %cst_26 : f32 to vector<8x8xf32>
    %45 = arith.select %42, %44, %43 : vector<8x8xi1>, vector<8x8xf32>
    %46 = arith.index_cast %35 : i32 to index
    %c0_27 = arith.constant 0 : index
    %47 = vector.load %arg19[%46, %c0_27] : memref<8x1xf32, #tpu.memory_space<vmem>>, vector<8x1xf32>
    %48 = arith.index_cast %35 : i32 to index
    %c0_28 = arith.constant 0 : index
    %49 = vector.load %arg18[%48, %c0_28] : memref<8x96xf32, #tpu.memory_space<vmem>>, vector<8x16xf32>
    %c0_29 = arith.constant 0 : index
    %c32 = arith.constant 32 : index
    %50 = vector.load %arg18[%c0_29, %c32] : memref<8x96xf32, #tpu.memory_space<vmem>>, vector<8x16xf32>
    %c0_30 = arith.constant 0 : index
    %c64 = arith.constant 64 : index
    %51 = vector.load %arg18[%c0_30, %c64] : memref<8x96xf32, #tpu.memory_space<vmem>>, vector<8x16xf32>
    %52 = arith.truncf %49 : vector<8x16xf32> to vector<8x16xbf16>
    %53 = arith.truncf %50 : vector<8x16xf32> to vector<8x16xbf16>
    %cst_31 = arith.constant dense<0.000000e+00> : vector<8x8xf32>
    %54 = tpu.matmul %52, %53, %cst_31 {dimension_numbers = #tpu.dot_dimension_numbers<[1], [1], [0], [0], [0, 0, 1, 0], [], []>} : vector<8x16xbf16>, vector<8x16xbf16>, vector<8x8xf32> -> vector<8x8xf32>
    %cst_32 = arith.constant 0.707106769 : f32
    %55 = vector.broadcast %cst_32 : f32 to vector<8x8xf32>
    %56 = arith.mulf %54, %55 : vector<8x8xf32>
    %cst_33 = arith.constant 2.000000e+00 : f32
    %57 = vector.broadcast %cst_33 : f32 to vector<8x1xf32>
    %58 = arith.addf %47, %57 : vector<8x1xf32>
    %59 = vector.broadcast %58 : vector<8x1xf32> to vector<8x8xf32>
    %60 = arith.cmpf ogt, %45, %59 : vector<8x8xf32>
    %cst_34 = arith.constant -1.000000e+30 : f32
    %61 = vector.broadcast %cst_34 : f32 to vector<8x8xf32>
    %62 = arith.select %60, %61, %56 : vector<8x8xi1>, vector<8x8xf32>
    %cst_35 = arith.constant dense<0xFF800000> : vector<8xf32>
    %63 = vector.multi_reduction <maximumf>, %62, %cst_35 [1] : vector<8x8xf32> to vector<8xf32>
    %64 = vector.shape_cast %63 : vector<8xf32> to vector<8x1xf32>
    %65 = vector.broadcast %64 : vector<8x1xf32> to vector<8x8xf32>
    %66 = arith.subf %62, %65 : vector<8x8xf32>
    %67 = math.exp %66 : vector<8x8xf32>
    %cst_36 = arith.constant dense<0.000000e+00> : vector<8xf32>
    %68 = vector.multi_reduction <add>, %67, %cst_36 [1] : vector<8x8xf32> to vector<8xf32>
    %69 = vector.shape_cast %68 : vector<8xf32> to vector<8x1xf32>
    %70 = tpu.reciprocal %69 {approx = true} : vector<8x1xf32> -> vector<8x1xf32>
    %71 = vector.broadcast %70 : vector<8x1xf32> to vector<8x8xf32>
    %72 = arith.mulf %67, %71 : vector<8x8xf32>
    %73 = arith.truncf %72 : vector<8x8xf32> to vector<8x8xbf16>
    %74 = arith.truncf %51 : vector<8x16xf32> to vector<8x16xbf16>
    %cst_37 = arith.constant dense<0.000000e+00> : vector<8x16xf32>
    %75 = tpu.matmul %73, %74, %cst_37 {dimension_numbers = #tpu.dot_dimension_numbers<[1], [0], [0], [1], [0, 0, 1, 1], [], []>} : vector<8x8xbf16>, vector<8x16xbf16>, vector<8x16xf32> -> vector<8x16xf32>
    %76 = arith.index_cast %35 : i32 to index
    %c0_38 = arith.constant 0 : index
    %77 = vector.load %arg20[%76, %c0_38] : memref<8x32xf32, #tpu.memory_space<vmem>>, vector<8x16xf32>
    tpu.vector_store %arg20[%76, %c0_38], %75 {strides = array<i32>} : memref<8x32xf32, #tpu.memory_space<vmem>>, vector<8x16xf32>,
    %78 = arith.index_cast %35 : i32 to index
    %c16 = arith.constant 16 : index
    %79 = vector.load %arg18[%78, %c16] : memref<8x96xf32, #tpu.memory_space<vmem>>, vector<8x16xf32>
    %c0_39 = arith.constant 0 : index
    %c48 = arith.constant 48 : index
    %80 = vector.load %arg18[%c0_39, %c48] : memref<8x96xf32, #tpu.memory_space<vmem>>, vector<8x16xf32>
    %c0_40 = arith.constant 0 : index
    %c80 = arith.constant 80 : index
    %81 = vector.load %arg18[%c0_40, %c80] : memref<8x96xf32, #tpu.memory_space<vmem>>, vector<8x16xf32>
    %82 = arith.truncf %79 : vector<8x16xf32> to vector<8x16xbf16>
    %83 = arith.truncf %80 : vector<8x16xf32> to vector<8x16xbf16>
    %cst_41 = arith.constant dense<0.000000e+00> : vector<8x8xf32>
    %84 = tpu.matmul %82, %83, %cst_41 {dimension_numbers = #tpu.dot_dimension_numbers<[1], [1], [0], [0], [0, 0, 1, 0], [], []>} : vector<8x16xbf16>, vector<8x16xbf16>, vector<8x8xf32> -> vector<8x8xf32>
    %cst_42 = arith.constant 0.707106769 : f32
    %85 = vector.broadcast %cst_42 : f32 to vector<8x8xf32>
    %86 = arith.mulf %84, %85 : vector<8x8xf32>
    %cst_43 = arith.constant 4.000000e+00 : f32
    %87 = vector.broadcast %cst_43 : f32 to vector<8x1xf32>
    %88 = arith.addf %47, %87 : vector<8x1xf32>
    %89 = vector.broadcast %88 : vector<8x1xf32> to vector<8x8xf32>
    %90 = arith.cmpf ogt, %45, %89 : vector<8x8xf32>
    %cst_44 = arith.constant -1.000000e+30 : f32
    %91 = vector.broadcast %cst_44 : f32 to vector<8x8xf32>
    %92 = arith.select %90, %91, %86 : vector<8x8xi1>, vector<8x8xf32>
    %cst_45 = arith.constant dense<0xFF800000> : vector<8xf32>
    %93 = vector.multi_reduction <maximumf>, %92, %cst_45 [1] : vector<8x8xf32> to vector<8xf32>
    %94 = vector.shape_cast %93 : vector<8xf32> to vector<8x1xf32>
    %95 = vector.broadcast %94 : vector<8x1xf32> to vector<8x8xf32>
    %96 = arith.subf %92, %95 : vector<8x8xf32>
    %97 = math.exp %96 : vector<8x8xf32>
    %cst_46 = arith.constant dense<0.000000e+00> : vector<8xf32>
    %98 = vector.multi_reduction <add>, %97, %cst_46 [1] : vector<8x8xf32> to vector<8xf32>
    %99 = vector.shape_cast %98 : vector<8xf32> to vector<8x1xf32>
    %100 = tpu.reciprocal %99 {approx = true} : vector<8x1xf32> -> vector<8x1xf32>
    %101 = vector.broadcast %100 : vector<8x1xf32> to vector<8x8xf32>
    %102 = arith.mulf %97, %101 : vector<8x8xf32>
    %103 = arith.truncf %102 : vector<8x8xf32> to vector<8x8xbf16>
    %104 = arith.truncf %81 : vector<8x16xf32> to vector<8x16xbf16>
    %cst_47 = arith.constant dense<0.000000e+00> : vector<8x16xf32>
    %105 = tpu.matmul %103, %104, %cst_47 {dimension_numbers = #tpu.dot_dimension_numbers<[1], [0], [0], [1], [0, 0, 1, 1], [], []>} : vector<8x8xbf16>, vector<8x16xbf16>, vector<8x16xf32> -> vector<8x16xf32>
    %106 = arith.index_cast %35 : i32 to index
    %c16_48 = arith.constant 16 : index
    %107 = vector.load %arg20[%106, %c16_48] : memref<8x32xf32, #tpu.memory_space<vmem>>, vector<8x16xf32>
    tpu.vector_store %arg20[%106, %c16_48], %105 {strides = array<i32>} : memref<8x32xf32, #tpu.memory_space<vmem>>, vector<8x16xf32>,
    %c1_i32_49 = arith.constant 1 : i32
    %c0_50 = arith.constant 0 : index
    %c0_51 = arith.constant 0 : index
    %108 = vector.load %arg20[%c0_50, %c0_51] : memref<8x32xf32, #tpu.memory_space<vmem>>, vector<8x32xf32>
    %c0_52 = arith.constant 0 : index
    %c0_53 = arith.constant 0 : index
    %109 = vector.load %arg8[%c0_52, %c0_53] : memref<32x32xf32, #tpu.memory_space<vmem>>, vector<32x32xf32>
    %110 = arith.truncf %108 : vector<8x32xf32> to vector<8x32xbf16>
    %111 = arith.truncf %109 : vector<32x32xf32> to vector<32x32xbf16>
    %cst_54 = arith.constant dense<0.000000e+00> : vector<8x32xf32>
    %112 = tpu.matmul %110, %111, %cst_54 {dimension_numbers = #tpu.dot_dimension_numbers<[1], [0], [0], [1], [0, 0, 1, 1], [], []>} : vector<8x32xbf16>, vector<32x32xbf16>, vector<8x32xf32> -> vector<8x32xf32>
    %113 = arith.addf %1, %112 : vector<8x32xf32>
    %cst_55 = arith.constant dense<0.000000e+00> : vector<8xf32>
    %114 = vector.multi_reduction <add>, %113, %cst_55 [1] : vector<8x32xf32> to vector<8xf32>
    %115 = vector.shape_cast %114 : vector<8xf32> to vector<8x1xf32>
    %cst_56 = arith.constant 3.200000e+01 : f32
    %116 = vector.broadcast %cst_56 : f32 to vector<8x1xf32>
    %117 = arith.divf %115, %116 : vector<8x1xf32>
    %118 = vector.broadcast %117 : vector<8x1xf32> to vector<8x32xf32>
    %119 = arith.subf %113, %118 : vector<8x32xf32>
    %120 = arith.mulf %119, %119 : vector<8x32xf32>
    %cst_57 = arith.constant dense<0.000000e+00> : vector<8xf32>
    %121 = vector.multi_reduction <add>, %120, %cst_57 [1] : vector<8x32xf32> to vector<8xf32>
    %122 = vector.shape_cast %121 : vector<8xf32> to vector<8x1xf32>
    %cst_58 = arith.constant 3.200000e+01 : f32
    %123 = vector.broadcast %cst_58 : f32 to vector<8x1xf32>
    %124 = arith.divf %122, %123 : vector<8x1xf32>
    %125 = vector.broadcast %117 : vector<8x1xf32> to vector<8x32xf32>
    %126 = arith.subf %113, %125 : vector<8x32xf32>
    %cst_59 = arith.constant 9.99999974E-6 : f32
    %127 = vector.broadcast %cst_59 : f32 to vector<8x1xf32>
    %128 = arith.addf %124, %127 : vector<8x1xf32>
    %129 = math.rsqrt %128 : vector<8x1xf32>
    %130 = vector.broadcast %129 : vector<8x1xf32> to vector<8x32xf32>
    %131 = arith.mulf %126, %130 : vector<8x32xf32>
    %c0_60 = arith.constant 0 : index
    %c0_61 = arith.constant 0 : index
    %132 = vector.load %arg13[%c0_60, %c0_61] : memref<1x32xf32, #tpu.memory_space<vmem>>, vector<1x32xf32>
    %133 = vector.broadcast %132 : vector<1x32xf32> to vector<8x32xf32>
    %134 = arith.mulf %131, %133 : vector<8x32xf32>
    %c0_62 = arith.constant 0 : index
    %c0_63 = arith.constant 0 : index
    %135 = vector.load %arg14[%c0_62, %c0_63] : memref<1x32xf32, #tpu.memory_space<vmem>>, vector<1x32xf32>
    %136 = vector.broadcast %135 : vector<1x32xf32> to vector<8x32xf32>
    %137 = arith.addf %134, %136 : vector<8x32xf32>
    %c0_64 = arith.constant 0 : index
    %c0_65 = arith.constant 0 : index
    %138 = vector.load %arg9[%c0_64, %c0_65] : memref<32x32xf32, #tpu.memory_space<vmem>>, vector<32x32xf32>
    %139 = arith.truncf %137 : vector<8x32xf32> to vector<8x32xbf16>
    %140 = arith.truncf %138 : vector<32x32xf32> to vector<32x32xbf16>
    %cst_66 = arith.constant dense<0.000000e+00> : vector<8x32xf32>
    %141 = tpu.matmul %139, %140, %cst_66 {dimension_numbers = #tpu.dot_dimension_numbers<[1], [0], [0], [1], [0, 0, 1, 1], [], []>} : vector<8x32xbf16>, vector<32x32xbf16>, vector<8x32xf32> -> vector<8x32xf32>
    %c0_67 = arith.constant 0 : index
    %c0_68 = arith.constant 0 : index
    %142 = vector.load %arg10[%c0_67, %c0_68] : memref<1x32xf32, #tpu.memory_space<vmem>>, vector<1x32xf32>
    %143 = vector.broadcast %142 : vector<1x32xf32> to vector<8x32xf32>
    %144 = arith.addf %141, %143 : vector<8x32xf32>
    %cst_69 = arith.constant 0.000000e+00 : f32
    %145 = vector.broadcast %cst_69 : f32 to vector<8x32xf32>
    %146 = arith.maximumf %144, %145 : vector<8x32xf32>
    %c0_70 = arith.constant 0 : index
    %c0_71 = arith.constant 0 : index
    %147 = vector.load %arg11[%c0_70, %c0_71] : memref<32x32xf32, #tpu.memory_space<vmem>>, vector<32x32xf32>
    %148 = arith.truncf %146 : vector<8x32xf32> to vector<8x32xbf16>
    %149 = arith.truncf %147 : vector<32x32xf32> to vector<32x32xbf16>
    %cst_72 = arith.constant dense<0.000000e+00> : vector<8x32xf32>
    %150 = tpu.matmul %148, %149, %cst_72 {dimension_numbers = #tpu.dot_dimension_numbers<[1], [0], [0], [1], [0, 0, 1, 1], [], []>} : vector<8x32xbf16>, vector<32x32xbf16>, vector<8x32xf32> -> vector<8x32xf32>
    %c0_73 = arith.constant 0 : index
    %c0_74 = arith.constant 0 : index
    %151 = vector.load %arg12[%c0_73, %c0_74] : memref<1x32xf32, #tpu.memory_space<vmem>>, vector<1x32xf32>
    %152 = vector.broadcast %151 : vector<1x32xf32> to vector<8x32xf32>
    %153 = arith.addf %150, %152 : vector<8x32xf32>
    %154 = arith.addf %137, %153 : vector<8x32xf32>
    %cst_75 = arith.constant dense<0.000000e+00> : vector<8xf32>
    %155 = vector.multi_reduction <add>, %154, %cst_75 [1] : vector<8x32xf32> to vector<8xf32>
    %156 = vector.shape_cast %155 : vector<8xf32> to vector<8x1xf32>
    %cst_76 = arith.constant 3.200000e+01 : f32
    %157 = vector.broadcast %cst_76 : f32 to vector<8x1xf32>
    %158 = arith.divf %156, %157 : vector<8x1xf32>
    %159 = vector.broadcast %158 : vector<8x1xf32> to vector<8x32xf32>
    %160 = arith.subf %154, %159 : vector<8x32xf32>
    %161 = arith.mulf %160, %160 : vector<8x32xf32>
    %cst_77 = arith.constant dense<0.000000e+00> : vector<8xf32>
    %162 = vector.multi_reduction <add>, %161, %cst_77 [1] : vector<8x32xf32> to vector<8xf32>
    %163 = vector.shape_cast %162 : vector<8xf32> to vector<8x1xf32>
    %cst_78 = arith.constant 3.200000e+01 : f32
    %164 = vector.broadcast %cst_78 : f32 to vector<8x1xf32>
    %165 = arith.divf %163, %164 : vector<8x1xf32>
    %166 = vector.broadcast %158 : vector<8x1xf32> to vector<8x32xf32>
    %167 = arith.subf %154, %166 : vector<8x32xf32>
    %cst_79 = arith.constant 9.99999974E-6 : f32
    %168 = vector.broadcast %cst_79 : f32 to vector<8x1xf32>
    %169 = arith.addf %165, %168 : vector<8x1xf32>
    %170 = math.rsqrt %169 : vector<8x1xf32>
    %171 = vector.broadcast %170 : vector<8x1xf32> to vector<8x32xf32>
    %172 = arith.mulf %167, %171 : vector<8x32xf32>
    %c0_80 = arith.constant 0 : index
    %c0_81 = arith.constant 0 : index
    %173 = vector.load %arg15[%c0_80, %c0_81] : memref<1x32xf32, #tpu.memory_space<vmem>>, vector<1x32xf32>
    %174 = vector.broadcast %173 : vector<1x32xf32> to vector<8x32xf32>
    %175 = arith.mulf %172, %174 : vector<8x32xf32>
    %c0_82 = arith.constant 0 : index
    %c0_83 = arith.constant 0 : index
    %176 = vector.load %arg16[%c0_82, %c0_83] : memref<1x32xf32, #tpu.memory_space<vmem>>, vector<1x32xf32>
    %177 = vector.broadcast %176 : vector<1x32xf32> to vector<8x32xf32>
    %178 = arith.addf %175, %177 : vector<8x32xf32>
    %c0_84 = arith.constant 0 : index
    %c0_85 = arith.constant 0 : index
    %c0_86 = arith.constant 0 : index
    %179 = vector.load %arg17[%c0_84, %c0_85, %c0_86] : memref<1x8x32xf32, #tpu.memory_space<vmem>>, vector<1x8x32xf32>
    %180 = vector.shape_cast %179 : vector<1x8x32xf32> to vector<8x32xf32>
    %181 = vector.shape_cast %178 : vector<8x32xf32> to vector<1x8x32xf32>
    tpu.vector_store %arg17[%c0_84, %c0_85, %c0_86], %181 {strides = array<i32>} : memref<1x8x32xf32, #tpu.memory_space<vmem>>, vector<1x8x32xf32>,
    return
  }
  func.func @transform_0(%arg0: i32) -> (i32, i32, i32) {
    %c0_i32 = arith.constant 0 : i32
    %c0_i32_0 = arith.constant 0 : i32
    %c0_i32_1 = arith.constant 0 : i32
    return %arg0, %c0_i32, %c0_i32_0 : i32, i32, i32
  }
  func.func @transform_1(%arg0: i32) -> (i32, i32) {
    %c0_i32 = arith.constant 0 : i32
    %c0_i32_0 = arith.constant 0 : i32
    %c0_i32_1 = arith.constant 0 : i32
    return %c0_i32, %c0_i32_0 : i32, i32
  }
  func.func @transform_2(%arg0: i32) -> (i32, i32) {
    %c0_i32 = arith.constant 0 : i32
    %c0_i32_0 = arith.constant 0 : i32
    %c0_i32_1 = arith.constant 0 : i32
    return %c0_i32, %c0_i32_0 : i32, i32
  }
  func.func @transform_3(%arg0: i32) -> (i32, i32) {
    %c0_i32 = arith.constant 0 : i32
    %c0_i32_0 = arith.constant 0 : i32
    %c0_i32_1 = arith.constant 0 : i32
    return %c0_i32, %c0_i32_0 : i32, i32
  }
  func.func @transform_4(%arg0: i32) -> (i32, i32) {
    %c0_i32 = arith.constant 0 : i32
    %c0_i32_0 = arith.constant 0 : i32
    %c0_i32_1 = arith.constant 0 : i32
    return %c0_i32, %c0_i32_0 : i32, i32
  }
  func.func @transform_5(%arg0: i32) -> (i32, i32) {
    %c0_i32 = arith.constant 0 : i32
    %c0_i32_0 = arith.constant 0 : i32
    %c0_i32_1 = arith.constant 0 : i32
    return %c0_i32, %c0_i32_0 : i32, i32
  }
  func.func @transform_6(%arg0: i32) -> (i32, i32) {
    %c0_i32 = arith.constant 0 : i32
    %c0_i32_0 = arith.constant 0 : i32
    %c0_i32_1 = arith.constant 0 : i32
    return %c0_i32, %c0_i32_0 : i32, i32
  }
  func.func @transform_7(%arg0: i32) -> (i32, i32) {
    %c0_i32 = arith.constant 0 : i32
    %c0_i32_0 = arith.constant 0 : i32
    %c0_i32_1 = arith.constant 0 : i32
    return %c0_i32, %c0_i32_0 : i32, i32
  }
  func.func @transform_8(%arg0: i32) -> (i32, i32) {
    %c0_i32 = arith.constant 0 : i32
    %c0_i32_0 = arith.constant 0 : i32
    %c0_i32_1 = arith.constant 0 : i32
    return %c0_i32, %c0_i32_0 : i32, i32
  }
  func.func @transform_9(%arg0: i32) -> (i32, i32) {
    %c0_i32 = arith.constant 0 : i32
    %c0_i32_0 = arith.constant 0 : i32
    %c0_i32_1 = arith.constant 0 : i32
    return %c0_i32, %c0_i32_0 : i32, i32
  }
  func.func @transform_10(%arg0: i32) -> (i32, i32) {
    %c0_i32 = arith.constant 0 : i32
    %c0_i32_0 = arith.constant 0 : i32
    %c0_i32_1 = arith.constant 0 : i32
    return %c0_i32, %c0_i32_0 : i32, i32
  }
  func.func @transform_11(%arg0: i32) -> (i32, i32) {
    %c0_i32 = arith.constant 0 : i32
    %c0_i32_0 = arith.constant 0 : i32
    %c0_i32_1 = arith.constant 0 : i32
    return %c0_i32, %c0_i32_0 : i32, i32
  }
  func.func @transform_12(%arg0: i32) -> (i32, i32) {
    %c0_i32 = arith.constant 0 : i32
    %c0_i32_0 = arith.constant 0 : i32
    %c0_i32_1 = arith.constant 0 : i32
    return %c0_i32, %c0_i32_0 : i32, i32
  }
  func.func @transform_13(%arg0: i32) -> (i32, i32) {
    %c0_i32 = arith.constant 0 : i32
    %c0_i32_0 = arith.constant 0 : i32
    %c0_i32_1 = arith.constant 0 : i32
    return %c0_i32, %c0_i32_0 : i32, i32
  }
  func.func @transform_14(%arg0: i32) -> (i32, i32) {
    %c0_i32 = arith.constant 0 : i32
    %c0_i32_0 = arith.constant 0 : i32
    %c0_i32_1 = arith.constant 0 : i32
    return %c0_i32, %c0_i32_0 : i32, i32
  }
  func.func @transform_15(%arg0: i32) -> (i32, i32) {
    %c0_i32 = arith.constant 0 : i32
    %c0_i32_0 = arith.constant 0 : i32
    %c0_i32_1 = arith.constant 0 : i32
    return %c0_i32, %c0_i32_0 : i32, i32
  }
  func.func @transform_16(%arg0: i32) -> (i32, i32, i32) {
    %c0_i32 = arith.constant 0 : i32
    %c0_i32_0 = arith.constant 0 : i32
    %c0_i32_1 = arith.constant 0 : i32
    return %arg0, %c0_i32, %c0_i32_0 : i32, i32, i32
  }
}

</mosaic_0001>

<llo_original>
// kernel: encoder_layer_forward.1
$region0: #{encoder_layer_forward.1}
  #allocation0 [shape = 'u32[]', space=smem, size = 0x4, offset = 0x4, fixed_abs, tag = 'smem constant byte address 0x4 - core index']
  #allocation1 [shape = 'u32[144,128]{1,0:T(1,128)}', space=vmem, size = 0x12000, scoped, tag = 'internal scratch']
  #allocation2 [shape = 'f32[8,96]{1,0:T(8,128)}', space=vmem, size = 0x1000, scoped, tag = 'scratch operand']
  #allocation3 [shape = 'f32[8,1]{1,0:T(8,128)}', space=vmem, size = 0x1000, scoped, tag = 'scratch operand']
  #allocation4 [shape = 'f32[8,32]{1,0:T(8,128)}', space=vmem, size = 0x1000, scoped, tag = 'scratch operand']
  #allocation5 [shape = 'f32[1,1]{1,0:T(1,128)S(1)}', space=vmem, size = 0x200, scoped, tag = 'scoped memory for encoder_layer_forward.1']
  %s0 = inlined_call_operand.hbm [shape: f32[2,8,32], index: 0, kind: input, shape index: {}]
  %s1 = inlined_call_operand.vmem [shape: f32[32,32], index: 1, kind: input, shape index: {}]
  %s2 = inlined_call_operand.vmem [shape: f32[32,96], index: 2, kind: input, shape index: {}]
  %s3 = inlined_call_operand.vmem [shape: f32[1,96], index: 3, kind: input, shape index: {}]
  %s4 = inlined_call_operand.vmem [shape: f32[32,16], index: 4, kind: input, shape index: {}]
  %s5 = inlined_call_operand.vmem [shape: f32[1,16], index: 5, kind: input, shape index: {}]
  %s6 = inlined_call_operand.<no memory space> [shape: f32[1,1], index: 6, kind: input, shape index: {}]
  %s7 = inlined_call_operand.hbm [shape: f32[32,32], index: 7, kind: input, shape index: {}]
  %s8 = inlined_call_operand.hbm [shape: f32[32,32], index: 8, kind: input, shape index: {}]
  %s9 = inlined_call_operand.hbm [shape: f32[1,32], index: 9, kind: input, shape index: {}]
  %s10 = inlined_call_operand.hbm [shape: f32[32,32], index: 10, kind: input, shape index: {}]
  %s11 = inlined_call_operand.hbm [shape: f32[1,32], index: 11, kind: input, shape index: {}]
  %s12 = inlined_call_operand.hbm [shape: f32[1,32], index: 12, kind: input, shape index: {}]
  %s13 = inlined_call_operand.hbm [shape: f32[1,32], index: 13, kind: input, shape index: {}]
  %s14 = inlined_call_operand.hbm [shape: f32[1,32], index: 14, kind: input, shape index: {}]
  %s15 = inlined_call_operand.hbm [shape: f32[1,32], index: 15, kind: input, shape index: {}]
  %s16 = inlined_call_operand.hbm [shape: f32[2,8,32], index: 16, kind: output, shape index: {}]
  %s17 = sld [smem:[#allocation0]]
  $region137: #{encoder_layer_forward.1} parent=0
    _
  %s19 = ssub.s32 1, %s17
  %s20 = scalar_select 0, %s19, %s17
  %v21 = vstv %s6
  %22 = vst [vmem:[#allocation5] sm:$0x1] %v21
  $region1: #{encoder_layer_forward.1} parent=0
    #allocation6 [shape = 'u8[8192]{0}', space=vmem, size = 0x2000, scoped, tag = 'input window, operand 0']
    #allocation7 [shape = 's32[2]{0}', space=sflag, size = 0x8, scoped, tag = 'scoped memory for encoder_layer_forward.1']
    #allocation8 [shape = 's32[2]{0}', space=sflag, size = 0x8, scoped, tag = 'scoped memory for encoder_layer_forward.1']
    #allocation9 [shape = 'u8[16384]{0}', space=vmem, size = 0x4000, scoped, tag = 'input window, operand 7, single buffered']
    #allocation10 [shape = 's32[1]{0}', space=sflag, size = 0x4, scoped, tag = 'scoped memory for encoder_layer_forward.1']
    #allocation11 [shape = 'u8[16384]{0}', space=vmem, size = 0x4000, scoped, tag = 'input window, operand 8, single buffered']
    #allocation12 [shape = 'u8[512]{0}', space=vmem, size = 0x400, scoped, tag = 'input window, operand 9, single buffered']
    #allocation13 [shape = 's32[1]{0}', space=sflag, size = 0x4, scoped, tag = 'scoped memory for encoder_layer_forward.1']
    #allocation14 [shape = 'u8[16384]{0}', space=vmem, size = 0x4000, scoped, tag = 'input window, operand 10, single buffered']
    #allocation15 [shape = 'u8[512]{0}', space=vmem, size = 0x400, scoped, tag = 'input window, operand 11, single buffered']
    #allocation16 [shape = 's32[1]{0}', space=sflag, size = 0x4, scoped, tag = 'scoped memory for encoder_layer_forward.1']
    #allocation17 [shape = 'u8[512]{0}', space=vmem, size = 0x400, scoped, tag = 'input window, operand 12, single buffered']
    #allocation18 [shape = 'u8[512]{0}', space=vmem, size = 0x400, scoped, tag = 'input window, operand 13, single buffered']
    #allocation19 [shape = 's32[1]{0}', space=sflag, size = 0x4, scoped, tag = 'scoped memory for encoder_layer_forward.1']
    #allocation20 [shape = 'u8[512]{0}', space=vmem, size = 0x400, scoped, tag = 'input window, operand 14, single buffered']
    #allocation21 [shape = 'u8[512]{0}', space=vmem, size = 0x400, scoped, tag = 'input window, operand 15, single buffered']
    #allocation22 [shape = 's32[1]{0}', space=sflag, size = 0x4, scoped, tag = 'scoped memory for encoder_layer_forward.1']
    #allocation23 [shape = 'u8[8192]{0}', space=vmem, size = 0x2000, scoped, tag = 'output window, operand 0']
    %23 = vsyncpa [#allocation7], 0
    %s24 = scalar_lea.sflag [#allocation7], 1
    %25 = vsyncpa %s24, 0
    %26 = vsyncpa [#allocation10], 0
    %27 = vsyncpa [#allocation13], 0
    %28 = vsyncpa [#allocation16], 0
    %29 = vsyncpa [#allocation19], 0
    %30 = vsyncpa [#allocation22], 0
    %31 = vsyncpa [#allocation8], 0
    %s32 = scalar_lea.sflag [#allocation8], 1
    %33 = vsyncpa %s32, 0
    loop: start=0, step=1, limit=4
    $region2: #{encoder_layer_forward.1} parent=1 // loop_pre_header
      _
    $region3: #{encoder_layer_forward.1} parent=1 // loop_header
      %s35 = sphi 0, %s39
      %p36 = scmp.ge.s32.totalorder %s35, 4
      %s45 = sphi 0, %s47
      %s48 = sphi 0, %s45
      %s49 = sphi 0, %s48
      %s65 = sphi 0, %s49
      %s69 = sphi 0, %s69
      %s71 = sphi 0, %s69
      %s72 = sphi 0, %s71
      %s86 = sphi 0, %s72
      %s90 = sphi 0, %s90
      %s92 = sphi 0, %s90
      %s93 = sphi 0, %s92
      %s107 = sphi 0, %s93
      %s111 = sphi 0, %s111
      %s113 = sphi 0, %s111
      %s114 = sphi 0, %s113
      %s128 = sphi 0, %s114
      %s132 = sphi 0, %s132
      %s134 = sphi 0, %s132
      %s135 = sphi 0, %s134
      %s149 = sphi 0, %s135
      %s153 = sphi 0, %s153
      %s155 = sphi 0, %s153
      %s156 = sphi 0, %s155
      %s170 = sphi 0, %s156
      %s174 = sphi 0, %s174
      %s176 = sphi 0, %s174
      %s177 = sphi 0, %s176
      %s191 = sphi 0, %s177
      %s195 = sphi 0, %s195
      %s197 = sphi 0, %s195
      %s198 = sphi 0, %s197
      %s212 = sphi 0, %s198
      %s216 = sphi 0, %s216
      %s218 = sphi 0, %s216
      %s219 = sphi 0, %s218
      %s233 = sphi 0, %s219
      %s237 = sphi 0, %s237
      %s239 = sphi 0, %s237
      %s240 = sphi 0, %s239
      %s254 = sphi 0, %s240
      %s258 = sphi 0, %s258
      %s260 = sphi 0, %s258
      %s261 = sphi 0, %s260
      %s275 = sphi 0, %s261
      %s279 = sphi 0, %s279
      %s281 = sphi 0, %s279
      %s282 = sphi 0, %s281
      %s296 = sphi 0, %s282
      %s300 = sphi 0, %s300
      %s302 = sphi 0, %s300
      %s303 = sphi 0, %s302
      %s317 = sphi 0, %s303
      %s321 = sphi 0, %s321
      %s323 = sphi 0, %s321
      %s324 = sphi 0, %s323
      %s338 = sphi 0, %s324
      %s342 = sphi 0, %s342
      %s344 = sphi 0, %s342
      %s345 = sphi 0, %s344
      %s359 = sphi 0, %s345
      %s363 = sphi 0, %s363
      %s365 = sphi 0, %s363
      %s366 = sphi 0, %s365
      %s380 = sphi 0, %s366
      %s386 = sphi 0, %s388
      %s389 = sphi 0, %s386
      %s390 = sphi 0, %s389
      %s406 = sphi 0, %s390
    $region4: #{encoder_layer_forward.1} parent=1 // loop_header_branch
      %38 = sbr.rel (%p36) target = $region8
    $region5: #{encoder_layer_forward.1} parent=1 // loop_body
      %s40 = ssub.s32 %s35, 1
      %s41 = ssub.s32 %s35, 2
      %s42 = sadd.s32 %s35, 1
      %s43 = ssub.s32 %s35, %s42
      %p44 = scmp.eq.s32.totalorder %s43, 0
      %s46 = sadd.s32 %s45, 1
      %s47 = scalar_select %p44, %s45, %s46
      %p50 = pneg %p44
      %p51 = scmp.eq.s32.totalorder %s35, 1
      %p52 = por %p50, %p51
      %p53 = scmp.ne.s32.totalorder %s45, %s48
      %p54 = scmp.eq.s32.totalorder %s35, 0
      %p55 = por %p53, %p54
      %p56 = scmp.ne.s32.totalorder %s45, %s48
      %p57 = scmp.eq.s32.totalorder %s40, 1
      %p58 = por %p56, %p57
      %p59 = scmp.ne.s32.totalorder %s48, %s49
      %p60 = scmp.eq.s32.totalorder %s40, 0
      %p61 = por %p59, %p60
      %p62 = scmp.ne.s32.totalorder %s48, %s49
      %p63 = scmp.eq.s32.totalorder %s41, 1
      %p64 = por %p62, %p63
      %p66 = scmp.ne.s32.totalorder %s49, %s65
      %p67 = scmp.eq.s32.totalorder %s41, 0
      %p68 = por %p66, %p67
      %s70 = sadd.s32 %s69, 1
      %p73 = scmp.eq.s32.totalorder %s35, 1
      %p74 = scmp.ne.s32.totalorder %s69, %s71
      %p75 = scmp.eq.s32.totalorder %s35, 0
      %p76 = por %p74, %p75
      %p77 = scmp.ne.s32.totalorder %s69, %s71
      %p78 = scmp.eq.s32.totalorder %s40, 1
      %p79 = por %p77, %p78
      %p80 = scmp.ne.s32.totalorder %s71, %s72
      %p81 = scmp.eq.s32.totalorder %s40, 0
      %p82 = por %p80, %p81
      %p83 = scmp.ne.s32.totalorder %s71, %s72
      %p84 = scmp.eq.s32.totalorder %s41, 1
      %p85 = por %p83, %p84
      %p87 = scmp.ne.s32.totalorder %s72, %s86
      %p88 = scmp.eq.s32.totalorder %s41, 0
      %p89 = por %p87, %p88
      %s91 = sadd.s32 %s90, 1
      %p94 = scmp.eq.s32.totalorder %s35, 1
      %p95 = scmp.ne.s32.totalorder %s90, %s92
      %p96 = scmp.eq.s32.totalorder %s35, 0
      %p97 = por %p95, %p96
      %p98 = scmp.ne.s32.totalorder %s90, %s92
      %p99 = scmp.eq.s32.totalorder %s40, 1
      %p100 = por %p98, %p99
      %p101 = scmp.ne.s32.totalorder %s92, %s93
      %p102 = scmp.eq.s32.totalorder %s40, 0
      %p103 = por %p101, %p102
      %p104 = scmp.ne.s32.totalorder %s92, %s93
      %p105 = scmp.eq.s32.totalorder %s41, 1
      %p106 = por %p104, %p105
      %p108 = scmp.ne.s32.totalorder %s93, %s107
      %p109 = scmp.eq.s32.totalorder %s41, 0
      %p110 = por %p108, %p109
      %s112 = sadd.s32 %s111, 1
      %p115 = scmp.eq.s32.totalorder %s35, 1
      %p116 = scmp.ne.s32.totalorder %s111, %s113
      %p117 = scmp.eq.s32.totalorder %s35, 0
      %p118 = por %p116, %p117
      %p119 = scmp.ne.s32.totalorder %s111, %s113
      %p120 = scmp.eq.s32.totalorder %s40, 1
      %p121 = por %p119, %p120
      %p122 = scmp.ne.s32.totalorder %s113, %s114
      %p123 = scmp.eq.s32.totalorder %s40, 0
      %p124 = por %p122, %p123
      %p125 = scmp.ne.s32.totalorder %s113, %s114
      %p126 = scmp.eq.s32.totalorder %s41, 1
      %p127 = por %p125, %p126
      %p129 = scmp.ne.s32.totalorder %s114, %s128
      %p130 = scmp.eq.s32.totalorder %s41, 0
      %p131 = por %p129, %p130
      %s133 = sadd.s32 %s132, 1
      %p136 = scmp.eq.s32.totalorder %s35, 1
      %p137 = scmp.ne.s32.totalorder %s132, %s134
      %p138 = scmp.eq.s32.totalorder %s35, 0
      %p139 = por %p137, %p138
      %p140 = scmp.ne.s32.totalorder %s132, %s134
      %p141 = scmp.eq.s32.totalorder %s40, 1
      %p142 = por %p140, %p141
      %p143 = scmp.ne.s32.totalorder %s134, %s135
      %p144 = scmp.eq.s32.totalorder %s40, 0
      %p145 = por %p143, %p144
      %p146 = scmp.ne.s32.totalorder %s134, %s135
      %p147 = scmp.eq.s32.totalorder %s41, 1
      %p148 = por %p146, %p147
      %p150 = scmp.ne.s32.totalorder %s135, %s149
      %p151 = scmp.eq.s32.totalorder %s41, 0
      %p152 = por %p150, %p151
      %s154 = sadd.s32 %s153, 1
      %p157 = scmp.eq.s32.totalorder %s35, 1
      %p158 = scmp.ne.s32.totalorder %s153, %s155
      %p159 = scmp.eq.s32.totalorder %s35, 0
      %p160 = por %p158, %p159
      %p161 = scmp.ne.s32.totalorder %s153, %s155
      %p162 = scmp.eq.s32.totalorder %s40, 1
      %p163 = por %p161, %p162
      %p164 = scmp.ne.s32.totalorder %s155, %s156
      %p165 = scmp.eq.s32.totalorder %s40, 0
      %p166 = por %p164, %p165
      %p167 = scmp.ne.s32.totalorder %s155, %s156
      %p168 = scmp.eq.s32.totalorder %s41, 1
      %p169 = por %p167, %p168
      %p171 = scmp.ne.s32.totalorder %s156, %s170
      %p172 = scmp.eq.s32.totalorder %s41, 0
      %p173 = por %p171, %p172
      %s175 = sadd.s32 %s174, 1
      %p178 = scmp.eq.s32.totalorder %s35, 1
      %p179 = scmp.ne.s32.totalorder %s174, %s176
      %p180 = scmp.eq.s32.totalorder %s35, 0
      %p181 = por %p179, %p180
      %p182 = scmp.ne.s32.totalorder %s174, %s176
      %p183 = scmp.eq.s32.totalorder %s40, 1
      %p184 = por %p182, %p183
      %p185 = scmp.ne.s32.totalorder %s176, %s177
      %p186 = scmp.eq.s32.totalorder %s40, 0
      %p187 = por %p185, %p186
      %p188 = scmp.ne.s32.totalorder %s176, %s177
      %p189 = scmp.eq.s32.totalorder %s41, 1
      %p190 = por %p188, %p189
      %p192 = scmp.ne.s32.totalorder %s177, %s191
      %p193 = scmp.eq.s32.totalorder %s41, 0
      %p194 = por %p192, %p193
      %s196 = sadd.s32 %s195, 1
      %p199 = scmp.eq.s32.totalorder %s35, 1
      %p200 = scmp.ne.s32.totalorder %s195, %s197
      %p201 = scmp.eq.s32.totalorder %s35, 0
      %p202 = por %p200, %p201
      %p203 = scmp.ne.s32.totalorder %s195, %s197
      %p204 = scmp.eq.s32.totalorder %s40, 1
      %p205 = por %p203, %p204
      %p206 = scmp.ne.s32.totalorder %s197, %s198
      %p207 = scmp.eq.s32.totalorder %s40, 0
      %p208 = por %p206, %p207
      %p209 = scmp.ne.s32.totalorder %s197, %s198
      %p210 = scmp.eq.s32.totalorder %s41, 1
      %p211 = por %p209, %p210
      %p213 = scmp.ne.s32.totalorder %s198, %s212
      %p214 = scmp.eq.s32.totalorder %s41, 0
      %p215 = por %p213, %p214
      %s217 = sadd.s32 %s216, 1
      %p220 = scmp.eq.s32.totalorder %s35, 1
      %p221 = scmp.ne.s32.totalorder %s216, %s218
      %p222 = scmp.eq.s32.totalorder %s35, 0
      %p223 = por %p221, %p222
      %p224 = scmp.ne.s32.totalorder %s216, %s218
      %p225 = scmp.eq.s32.totalorder %s40, 1
      %p226 = por %p224, %p225
      %p227 = scmp.ne.s32.totalorder %s218, %s219
      %p228 = scmp.eq.s32.totalorder %s40, 0
      %p229 = por %p227, %p228
      %p230 = scmp.ne.s32.totalorder %s218, %s219
      %p231 = scmp.eq.s32.totalorder %s41, 1
      %p232 = por %p230, %p231
      %p234 = scmp.ne.s32.totalorder %s219, %s233
      %p235 = scmp.eq.s32.totalorder %s41, 0
      %p236 = por %p234, %p235
      %s238 = sadd.s32 %s237, 1
      %p241 = scmp.eq.s32.totalorder %s35, 1
      %p242 = scmp.ne.s32.totalorder %s237, %s239
      %p243 = scmp.eq.s32.totalorder %s35, 0
      %p244 = por %p242, %p243
      %p245 = scmp.ne.s32.totalorder %s237, %s239
      %p246 = scmp.eq.s32.totalorder %s40, 1
      %p247 = por %p245, %p246
      %p248 = scmp.ne.s32.totalorder %s239, %s240
      %p249 = scmp.eq.s32.totalorder %s40, 0
      %p250 = por %p248, %p249
      %p251 = scmp.ne.s32.totalorder %s239, %s240
      %p252 = scmp.eq.s32.totalorder %s41, 1
      %p253 = por %p251, %p252
      %p255 = scmp.ne.s32.totalorder %s240, %s254
      %p256 = scmp.eq.s32.totalorder %s41, 0
      %p257 = por %p255, %p256
      %s259 = sadd.s32 %s258, 1
      %p262 = scmp.eq.s32.totalorder %s35, 1
      %p263 = scmp.ne.s32.totalorder %s258, %s260
      %p264 = scmp.eq.s32.totalorder %s35, 0
      %p265 = por %p263, %p264
      %p266 = scmp.ne.s32.totalorder %s258, %s260
      %p267 = scmp.eq.s32.totalorder %s40, 1
      %p268 = por %p266, %p267
      %p269 = scmp.ne.s32.totalorder %s260, %s261
      %p270 = scmp.eq.s32.totalorder %s40, 0
      %p271 = por %p269, %p270
      %p272 = scmp.ne.s32.totalorder %s260, %s261
      %p273 = scmp.eq.s32.totalorder %s41, 1
      %p274 = por %p272, %p273
      %p276 = scmp.ne.s32.totalorder %s261, %s275
      %p277 = scmp.eq.s32.totalorder %s41, 0
      %p278 = por %p276, %p277
      %s280 = sadd.s32 %s279, 1
      %p283 = scmp.eq.s32.totalorder %s35, 1
      %p284 = scmp.ne.s32.totalorder %s279, %s281
      %p285 = scmp.eq.s32.totalorder %s35, 0
      %p286 = por %p284, %p285
      %p287 = scmp.ne.s32.totalorder %s279, %s281
      %p288 = scmp.eq.s32.totalorder %s40, 1
      %p289 = por %p287, %p288
      %p290 = scmp.ne.s32.totalorder %s281, %s282
      %p291 = scmp.eq.s32.totalorder %s40, 0
      %p292 = por %p290, %p291
      %p293 = scmp.ne.s32.totalorder %s281, %s282
      %p294 = scmp.eq.s32.totalorder %s41, 1
      %p295 = por %p293, %p294
      %p297 = scmp.ne.s32.totalorder %s282, %s296
      %p298 = scmp.eq.s32.totalorder %s41, 0
      %p299 = por %p297, %p298
      %s301 = sadd.s32 %s300, 1
      %p304 = scmp.eq.s32.totalorder %s35, 1
      %p305 = scmp.ne.s32.totalorder %s300, %s302
      %p306 = scmp.eq.s32.totalorder %s35, 0
      %p307 = por %p305, %p306
      %p308 = scmp.ne.s32.totalorder %s300, %s302
      %p309 = scmp.eq.s32.totalorder %s40, 1
      %p310 = por %p308, %p309
      %p311 = scmp.ne.s32.totalorder %s302, %s303
      %p312 = scmp.eq.s32.totalorder %s40, 0
      %p313 = por %p311, %p312
      %p314 = scmp.ne.s32.totalorder %s302, %s303
      %p315 = scmp.eq.s32.totalorder %s41, 1
      %p316 = por %p314, %p315
      %p318 = scmp.ne.s32.totalorder %s303, %s317
      %p319 = scmp.eq.s32.totalorder %s41, 0
      %p320 = por %p318, %p319
      %s322 = sadd.s32 %s321, 1
      %p325 = scmp.eq.s32.totalorder %s35, 1
      %p326 = scmp.ne.s32.totalorder %s321, %s323
      %p327 = scmp.eq.s32.totalorder %s35, 0
      %p328 = por %p326, %p327
      %p329 = scmp.ne.s32.totalorder %s321, %s323
      %p330 = scmp.eq.s32.totalorder %s40, 1
      %p331 = por %p329, %p330
      %p332 = scmp.ne.s32.totalorder %s323, %s324
      %p333 = scmp.eq.s32.totalorder %s40, 0
      %p334 = por %p332, %p333
      %p335 = scmp.ne.s32.totalorder %s323, %s324
      %p336 = scmp.eq.s32.totalorder %s41, 1
      %p337 = por %p335, %p336
      %p339 = scmp.ne.s32.totalorder %s324, %s338
      %p340 = scmp.eq.s32.totalorder %s41, 0
      %p341 = por %p339, %p340
      %s343 = sadd.s32 %s342, 1
      %p346 = scmp.eq.s32.totalorder %s35, 1
      %p347 = scmp.ne.s32.totalorder %s342, %s344
      %p348 = scmp.eq.s32.totalorder %s35, 0
      %p349 = por %p347, %p348
      %p350 = scmp.ne.s32.totalorder %s342, %s344
      %p351 = scmp.eq.s32.totalorder %s40, 1
      %p352 = por %p350, %p351
      %p353 = scmp.ne.s32.totalorder %s344, %s345
      %p354 = scmp.eq.s32.totalorder %s40, 0
      %p355 = por %p353, %p354
      %p356 = scmp.ne.s32.totalorder %s344, %s345
      %p357 = scmp.eq.s32.totalorder %s41, 1
      %p358 = por %p356, %p357
      %p360 = scmp.ne.s32.totalorder %s345, %s359
      %p361 = scmp.eq.s32.totalorder %s41, 0
      %p362 = por %p360, %p361
      %s364 = sadd.s32 %s363, 1
      %p367 = scmp.eq.s32.totalorder %s35, 1
      %p368 = scmp.ne.s32.totalorder %s363, %s365
      %p369 = scmp.eq.s32.totalorder %s35, 0
      %p370 = por %p368, %p369
      %p371 = scmp.ne.s32.totalorder %s363, %s365
      %p372 = scmp.eq.s32.totalorder %s40, 1
      %p373 = por %p371, %p372
      %p374 = scmp.ne.s32.totalorder %s365, %s366
      %p375 = scmp.eq.s32.totalorder %s40, 0
      %p376 = por %p374, %p375
      %p377 = scmp.ne.s32.totalorder %s365, %s366
      %p378 = scmp.eq.s32.totalorder %s41, 1
      %p379 = por %p377, %p378
      %p381 = scmp.ne.s32.totalorder %s366, %s380
      %p382 = scmp.eq.s32.totalorder %s41, 0
      %p383 = por %p381, %p382
      %s384 = ssub.s32 %s35, %s42
      %p385 = scmp.eq.s32.totalorder %s384, 0
      %s387 = sadd.s32 %s386, 1
      %s388 = scalar_select %p385, %s386, %s387
      %p391 = pneg %p385
      %p392 = scmp.eq.s32.totalorder %s35, 1
      %p393 = por %p391, %p392
      %p394 = scmp.ne.s32.totalorder %s386, %s389
      %p395 = scmp.eq.s32.totalorder %s35, 0
      %p396 = por %p394, %p395
      %p397 = scmp.ne.s32.totalorder %s386, %s389
      %p398 = scmp.eq.s32.totalorder %s40, 1
      %p399 = por %p397, %p398
      %p400 = scmp.ne.s32.totalorder %s389, %s390
      %p401 = scmp.eq.s32.totalorder %s40, 0
      %p402 = por %p400, %p401
      %p403 = scmp.ne.s32.totalorder %s389, %s390
      %p404 = scmp.eq.s32.totalorder %s41, 1
      %p405 = por %p403, %p404
      %p407 = scmp.ne.s32.totalorder %s390, %s406
      %p408 = scmp.eq.s32.totalorder %s41, 0
      %p409 = por %p407, %p408
      %p410 = scmp.le.s32.totalorder 1, %s35
      %p411 = scmp.lt.s32.totalorder %s35, 3
      %p412 = pnand %p410, %p411
      %p413 = pneg %p412
      // Predicated region
      $region9: #{encoder_layer_forward.1} parent=5 // pred_check
        _
      $region10: #{encoder_layer_forward.1} parent=5 // pred_check_branch
        %415 = sbr.rel (%p412) target = $region12
      $region11: #{encoder_layer_forward.1} parent=5 // pred_region
        %s416 = ssub.s32 %s35, 1
        // Predicated region
        $region13: #{encoder_layer_forward.1} parent=11 // pred_check
          %p417 = pneg %p82
        $region14: #{encoder_layer_forward.1} parent=11 // pred_check_branch
          %419 = sbr.rel (%p417) target = $region16
        $region15: #{encoder_layer_forward.1} parent=11 // pred_region
          _
        $region16: #{encoder_layer_forward.1} parent=11 // pred_fallthru
          _
        // Predicated region
        $region17: #{encoder_layer_forward.1} parent=11 // pred_check
          %p420 = pneg %p103
        $region18: #{encoder_layer_forward.1} parent=11 // pred_check_branch
          %422 = sbr.rel (%p420) target = $region20
        $region19: #{encoder_layer_forward.1} parent=11 // pred_region
          _
        $region20: #{encoder_layer_forward.1} parent=11 // pred_fallthru
          _
        // Predicated region
        $region21: #{encoder_layer_forward.1} parent=11 // pred_check
          %p423 = pneg %p124
        $region22: #{encoder_layer_forward.1} parent=11 // pred_check_branch
          %425 = sbr.rel (%p423) target = $region24
        $region23: #{encoder_layer_forward.1} parent=11 // pred_region
          _
        $region24: #{encoder_layer_forward.1} parent=11 // pred_fallthru
          _
        // Predicated region
        $region25: #{encoder_layer_forward.1} parent=11 // pred_check
          %p426 = pneg %p145
        $region26: #{encoder_layer_forward.1} parent=11 // pred_check_branch
          %428 = sbr.rel (%p426) target = $region28
        $region27: #{encoder_layer_forward.1} parent=11 // pred_region
          _
        $region28: #{encoder_layer_forward.1} parent=11 // pred_fallthru
          _
        // Predicated region
        $region29: #{encoder_layer_forward.1} parent=11 // pred_check
          %p429 = pneg %p166
        $region30: #{encoder_layer_forward.1} parent=11 // pred_check_branch
          %431 = sbr.rel (%p429) target = $region32
        $region31: #{encoder_layer_forward.1} parent=11 // pred_region
          _
        $region32: #{encoder_layer_forward.1} parent=11 // pred_fallthru
          _
        // Predicated region
        $region33: #{encoder_layer_forward.1} parent=11 // pred_check
          %p432 = pneg %p187
        $region34: #{encoder_layer_forward.1} parent=11 // pred_check_branch
          %434 = sbr.rel (%p432) target = $region36
        $region35: #{encoder_layer_forward.1} parent=11 // pred_region
          _
        $region36: #{encoder_layer_forward.1} parent=11 // pred_fallthru
          _
        // Predicated region
        $region37: #{encoder_layer_forward.1} parent=11 // pred_check
          %p435 = pneg %p208
        $region38: #{encoder_layer_forward.1} parent=11 // pred_check_branch
          %437 = sbr.rel (%p435) target = $region40
        $region39: #{encoder_layer_forward.1} parent=11 // pred_region
          %s439 = ssub.s32 512, 512
          %440 = vsyncadd [#allocation10], %s439
          %s441 = sshll.u32 [#allocation9], 4
          %s442 = int_to_ptr.vmem [resolvable:$true] %s441
          %447 = dma.hbm_to_vmem [thread:$0]  %s7, 512, %s442, [#allocation10], 128, 128, 8
        $region40: #{encoder_layer_forward.1} parent=11 // pred_fallthru
          _
        // Predicated region
        $region41: #{encoder_layer_forward.1} parent=11 // pred_check
          %p448 = pneg %p229
        $region42: #{encoder_layer_forward.1} parent=11 // pred_check_branch
          %450 = sbr.rel (%p448) target = $region44
        $region43: #{encoder_layer_forward.1} parent=11 // pred_region
          %s452 = ssub.s32 512, 512
          %453 = vsyncadd [#allocation10], %s452
          %s454 = sshll.u32 [#allocation11], 4
          %s455 = int_to_ptr.vmem [resolvable:$true] %s454
          %460 = dma.hbm_to_vmem [thread:$0]  %s8, 512, %s455, [#allocation10], 128, 128, 8
        $region44: #{encoder_layer_forward.1} parent=11 // pred_fallthru
          _
        // Predicated region
        $region45: #{encoder_layer_forward.1} parent=11 // pred_check
          %p461 = pneg %p250
        $region46: #{encoder_layer_forward.1} parent=11 // pred_check_branch
          %463 = sbr.rel (%p461) target = $region48
        $region47: #{encoder_layer_forward.1} parent=11 // pred_region
          %s465 = ssub.s32 16, 16
          %466 = vsyncadd [#allocation13], %s465
          %s468 = sshll.u32 [#allocation12], 4
          %s469 = int_to_ptr.vmem [resolvable:$true] %s468
          %471 = dma.hbm_to_vmem [thread:$0]  %s9, 16, %s469, [#allocation13]
        $region48: #{encoder_layer_forward.1} parent=11 // pred_fallthru
          _
        // Predicated region
        $region49: #{encoder_layer_forward.1} parent=11 // pred_check
          %p472 = pneg %p271
        $region50: #{encoder_layer_forward.1} parent=11 // pred_check_branch
          %474 = sbr.rel (%p472) target = $region52
        $region51: #{encoder_layer_forward.1} parent=11 // pred_region
          %s476 = ssub.s32 512, 512
          %477 = vsyncadd [#allocation13], %s476
          %s478 = sshll.u32 [#allocation14], 4
          %s479 = int_to_ptr.vmem [resolvable:$true] %s478
          %484 = dma.hbm_to_vmem [thread:$0]  %s10, 512, %s479, [#allocation13], 128, 128, 8
        $region52: #{encoder_layer_forward.1} parent=11 // pred_fallthru
          _
        // Predicated region
        $region53: #{encoder_layer_forward.1} parent=11 // pred_check
          %p485 = pneg %p292
        $region54: #{encoder_layer_forward.1} parent=11 // pred_check_branch
          %487 = sbr.rel (%p485) target = $region56
        $region55: #{encoder_layer_forward.1} parent=11 // pred_region
          %s489 = ssub.s32 16, 16
          %490 = vsyncadd [#allocation16], %s489
          %s492 = sshll.u32 [#allocation15], 4
          %s493 = int_to_ptr.vmem [resolvable:$true] %s492
          %495 = dma.hbm_to_vmem [thread:$0]  %s11, 16, %s493, [#allocation16]
        $region56: #{encoder_layer_forward.1} parent=11 // pred_fallthru
          _
        // Predicated region
        $region57: #{encoder_layer_forward.1} parent=11 // pred_check
          %p496 = pneg %p313
        $region58: #{encoder_layer_forward.1} parent=11 // pred_check_branch
          %498 = sbr.rel (%p496) target = $region60
        $region59: #{encoder_layer_forward.1} parent=11 // pred_region
          %s500 = ssub.s32 16, 16
          %501 = vsyncadd [#allocation16], %s500
          %s503 = sshll.u32 [#allocation17], 4
          %s504 = int_to_ptr.vmem [resolvable:$true] %s503
          %506 = dma.hbm_to_vmem [thread:$0]  %s12, 16, %s504, [#allocation16]
        $region60: #{encoder_layer_forward.1} parent=11 // pred_fallthru
          _
        // Predicated region
        $region61: #{encoder_layer_forward.1} parent=11 // pred_check
          %p507 = pneg %p334
        $region62: #{encoder_layer_forward.1} parent=11 // pred_check_branch
          %509 = sbr.rel (%p507) target = $region64
        $region63: #{encoder_layer_forward.1} parent=11 // pred_region
          %s511 = ssub.s32 16, 16
          %512 = vsyncadd [#allocation19], %s511
          %s514 = sshll.u32 [#allocation18], 4
          %s515 = int_to_ptr.vmem [resolvable:$true] %s514
          %517 = dma.hbm_to_vmem [thread:$0]  %s13, 16, %s515, [#allocation19]
        $region64: #{encoder_layer_forward.1} parent=11 // pred_fallthru
          _
        // Predicated region
        $region65: #{encoder_layer_forward.1} parent=11 // pred_check
          %p518 = pneg %p355
        $region66: #{encoder_layer_forward.1} parent=11 // pred_check_branch
          %520 = sbr.rel (%p518) target = $region68
        $region67: #{encoder_layer_forward.1} parent=11 // pred_region
          %s522 = ssub.s32 16, 16
          %523 = vsyncadd [#allocation19], %s522
          %s525 = sshll.u32 [#allocation20], 4
          %s526 = int_to_ptr.vmem [resolvable:$true] %s525
          %528 = dma.hbm_to_vmem [thread:$0]  %s14, 16, %s526, [#allocation19]
        $region68: #{encoder_layer_forward.1} parent=11 // pred_fallthru
          _
        // Predicated region
        $region69: #{encoder_layer_forward.1} parent=11 // pred_check
          %p529 = pneg %p376
        $region70: #{encoder_layer_forward.1} parent=11 // pred_check_branch
          %531 = sbr.rel (%p529) target = $region72
        $region71: #{encoder_layer_forward.1} parent=11 // pred_region
          %s533 = ssub.s32 16, 16
          %534 = vsyncadd [#allocation22], %s533
          %s536 = sshll.u32 [#allocation21], 4
          %s537 = int_to_ptr.vmem [resolvable:$true] %s536
          %539 = dma.hbm_to_vmem [thread:$0]  %s15, 16, %s537, [#allocation22]
        $region72: #{encoder_layer_forward.1} parent=11 // pred_fallthru
          _
      $region12: #{encoder_layer_forward.1} parent=5 // pred_fallthru
        _
      %p540 = scmp.lt.s32.totalorder %s35, 2
      // Predicated region
      $region73: #{encoder_layer_forward.1} parent=5 // pred_check
        %p541 = pneg %p540
      $region74: #{encoder_layer_forward.1} parent=5 // pred_check_branch
        %543 = sbr.rel (%p541) target = $region76
      $region75: #{encoder_layer_forward.1} parent=5 // pred_region
        // Predicated region
        $region77: #{encoder_layer_forward.1} parent=75 // pred_check
          %p544 = pneg %p55
        $region78: #{encoder_layer_forward.1} parent=75 // pred_check_branch
          %546 = sbr.rel (%p544) target = $region80
        $region79: #{encoder_layer_forward.1} parent=75 // pred_region
          %s547 = sand.u32 %s45, 1
          %s548 = scalar_lea.sflag [#allocation7], %s547
          %s549 = sand.u32 %s45, 1
          %s550 = smul.addr %s549, 8
          %s551 = scalar_lea.vmem [#allocation6], %s550
          %s553 = ssub.s32 128, 128
          %554 = vsyncadd %s548, %s553
          %s555 = smul.addr %s35, 128
          %s556 = scalar_lea.hbm %s0, %s555
          %s558 = sshll.u32 %s551, 4
          %s559 = int_to_ptr.vmem [resolvable:$true] %s558
          %561 = dma.hbm_to_vmem [thread:$0]  %s556, 128, %s559, %s548
        $region80: #{encoder_layer_forward.1} parent=75 // pred_fallthru
          _
      $region76: #{encoder_layer_forward.1} parent=5 // pred_fallthru
        _
      %p562 = scmp.le.s32.totalorder 1, %s35
      %p563 = scmp.lt.s32.totalorder %s35, 3
      %p564 = pnand %p562, %p563
      %p565 = pneg %p564
      // Predicated region
      $region81: #{encoder_layer_forward.1} parent=5 // pred_check
        _
      $region82: #{encoder_layer_forward.1} parent=5 // pred_check_branch
        %567 = sbr.rel (%p564) target = $region84
      $region83: #{encoder_layer_forward.1} parent=5 // pred_region
        %s568 = ssub.s32 %s35, 1
        %s569 = sand.u32 %s48, 1
        %s570 = scalar_lea.sflag [#allocation7], %s569
        %s571 = sand.u32 %s48, 1
        %s572 = smul.addr %s571, 8
        %s573 = scalar_lea.vmem [#allocation6], %s572
        // Predicated region
        $region85: #{encoder_layer_forward.1} parent=83 // pred_check
          %p574 = pneg %p61
        $region86: #{encoder_layer_forward.1} parent=83 // pred_check_branch
          %576 = sbr.rel (%p574) target = $region88
        $region87: #{encoder_layer_forward.1} parent=83 // pred_region
          %577 = dma.done %s570, 128
        $region88: #{encoder_layer_forward.1} parent=83 // pred_fallthru
          _
        // Predicated region
        $region89: #{encoder_layer_forward.1} parent=83 // pred_check
          %p578 = pneg %p208
        $region90: #{encoder_layer_forward.1} parent=83 // pred_check_branch
          %580 = sbr.rel (%p578) target = $region92
        $region91: #{encoder_layer_forward.1} parent=83 // pred_region
          %581 = dma.done [#allocation10], 512
        $region92: #{encoder_layer_forward.1} parent=83 // pred_fallthru
          _
        // Predicated region
        $region93: #{encoder_layer_forward.1} parent=83 // pred_check
          %p582 = pneg %p229
        $region94: #{encoder_layer_forward.1} parent=83 // pred_check_branch
          %584 = sbr.rel (%p582) target = $region96
        $region95: #{encoder_layer_forward.1} parent=83 // pred_region
          %585 = dma.done [#allocation10], 512
        $region96: #{encoder_layer_forward.1} parent=83 // pred_fallthru
          _
        // Predicated region
        $region97: #{encoder_layer_forward.1} parent=83 // pred_check
          %p586 = pneg %p250
        $region98: #{encoder_layer_forward.1} parent=83 // pred_check_branch
          %588 = sbr.rel (%p586) target = $region100
        $region99: #{encoder_layer_forward.1} parent=83 // pred_region
          %589 = dma.done [#allocation13], 16
        $region100: #{encoder_layer_forward.1} parent=83 // pred_fallthru
          _
        // Predicated region
        $region101: #{encoder_layer_forward.1} parent=83 // pred_check
          %p590 = pneg %p271
        $region102: #{encoder_layer_forward.1} parent=83 // pred_check_branch
          %592 = sbr.rel (%p590) target = $region104
        $region103: #{encoder_layer_forward.1} parent=83 // pred_region
          %593 = dma.done [#allocation13], 512
        $region104: #{encoder_layer_forward.1} parent=83 // pred_fallthru
          _
        // Predicated region
        $region105: #{encoder_layer_forward.1} parent=83 // pred_check
          %p594 = pneg %p292
        $region106: #{encoder_layer_forward.1} parent=83 // pred_check_branch
          %596 = sbr.rel (%p594) target = $region108
        $region107: #{encoder_layer_forward.1} parent=83 // pred_region
          %597 = dma.done [#allocation16], 16
        $region108: #{encoder_layer_forward.1} parent=83 // pred_fallthru
          _
        // Predicated region
        $region109: #{encoder_layer_forward.1} parent=83 // pred_check
          %p598 = pneg %p313
        $region110: #{encoder_layer_forward.1} parent=83 // pred_check_branch
          %600 = sbr.rel (%p598) target = $region112
        $region111: #{encoder_layer_forward.1} parent=83 // pred_region
          %601 = dma.done [#allocation16], 16
        $region112: #{encoder_layer_forward.1} parent=83 // pred_fallthru
          _
        // Predicated region
        $region113: #{encoder_layer_forward.1} parent=83 // pred_check
          %p602 = pneg %p334
        $region114: #{encoder_layer_forward.1} parent=83 // pred_check_branch
          %604 = sbr.rel (%p602) target = $region116
        $region115: #{encoder_layer_forward.1} parent=83 // pred_region
          %605 = dma.done [#allocation19], 16
        $region116: #{encoder_layer_forward.1} parent=83 // pred_fallthru
          _
        // Predicated region
        $region117: #{encoder_layer_forward.1} parent=83 // pred_check
          %p606 = pneg %p355
        $region118: #{encoder_layer_forward.1} parent=83 // pred_check_branch
          %608 = sbr.rel (%p606) target = $region120
        $region119: #{encoder_layer_forward.1} parent=83 // pred_region
          %609 = dma.done [#allocation19], 16
        $region120: #{encoder_layer_forward.1} parent=83 // pred_fallthru
          _
        // Predicated region
        $region121: #{encoder_layer_forward.1} parent=83 // pred_check
          %p610 = pneg %p376
        $region122: #{encoder_layer_forward.1} parent=83 // pred_check_branch
          %612 = sbr.rel (%p610) target = $region124
        $region123: #{encoder_layer_forward.1} parent=83 // pred_region
          %613 = dma.done [#allocation22], 16
        $region124: #{encoder_layer_forward.1} parent=83 // pred_fallthru
          _
        %s614 = sand.u32 %s48, 1
        %s615 = scalar_lea.sflag [#allocation7], %s614
        %s616 = sand.u32 %s48, 1
        %s617 = smul.addr %s616, 8
        %s618 = scalar_lea.vmem [#allocation6], %s617
        %p619 = pneg %p61
        %p620 = pneg %p58
        %p621 = pneg %p82
        %p622 = pneg %p79
        %p623 = pneg %p103
        %p624 = pneg %p100
        %p625 = pneg %p124
        %p626 = pneg %p121
        %p627 = pneg %p145
        %p628 = pneg %p142
        %p629 = pneg %p166
        %p630 = pneg %p163
        %p631 = pneg %p187
        %p632 = pneg %p184
        %p633 = pneg %p208
        %p634 = pneg %p205
        %p635 = pneg %p229
        %p636 = pneg %p226
        %p637 = pneg %p250
        %p638 = pneg %p247
        %p639 = pneg %p271
        %p640 = pneg %p268
        %p641 = pneg %p292
        %p642 = pneg %p289
        %p643 = pneg %p313
        %p644 = pneg %p310
        %p645 = pneg %p334
        %p646 = pneg %p331
        %p647 = pneg %p355
        %p648 = pneg %p352
        %p649 = pneg %p376
        %p650 = pneg %p373
        %p651 = pneg %p402
        %p652 = pneg %p399
        %s653 = sand.u32 %s389, 1
        %s654 = scalar_lea.sflag [#allocation8], %s653
        %s655 = sand.u32 %s389, 1
        %s656 = smul.addr %s655, 8
        %s657 = scalar_lea.vmem [#allocation23], %s656
        %v659 = vld [vmem:[%s573] sm:$0xff]
        %v660 = vld [vmem:[%s1] sm:$0xff]
        %v661 = vld [vmem:[%s1 + $0x8] sm:$0xff]
        %v662 = vld [vmem:[%s1 + $0x10] sm:$0xff]
        %v663 = vld [vmem:[%s1 + $0x18] sm:$0xff]
        %vm664 = vcmask 261120
        %v666 = vsel %vm664, %v659, 0
        %668 = vmatprep.subr.mxu0 0.0
        %669 = vmatpush1.msra.mxu0 %v660
        %670 = vmatprep.subr.mxu0 0.0
        %671 = vmatpush1.msra.mxu0 %v661
        %672 = vmatprep.subr.mxu0 0.0
        %673 = vmatpush1.msra.mxu0 %v662
        %674 = vmatprep.subr.mxu0 0.0
        %675 = vmatpush1.msra.mxu0 %v663
        %676 = vmatprep.subr.mxu0 0.0
        %677 = vmatpush1.msra.mxu0 0.0
        %678 = vmatprep.subr.mxu0 0.0
        %679 = vmatpush1.msra.mxu0 0.0
        %680 = vmatprep.subr.mxu0 0.0
        %681 = vmatpush1.msra.mxu0 0.0
        %682 = vmatprep.subr.mxu0 0.0
        %683 = vmatpush1.msra.mxu0 0.0
        %684 = vmatprep.subr.mxu0 0.0
        %685 = vmatpush1.msra.mxu0 0.0
        %686 = vmatprep.subr.mxu0 0.0
        %687 = vmatpush1.msra.mxu0 0.0
        %688 = vmatprep.subr.mxu0 0.0
        %689 = vmatpush1.msra.mxu0 0.0
        %690 = vmatprep.subr.mxu0 0.0
        %691 = vmatpush1.msra.mxu0 0.0
        %692 = vmatprep.subr.mxu0 0.0
        %693 = vmatpush1.msra.mxu0 0.0
        %694 = vmatprep.subr.mxu0 0.0
        %695 = vmatpush1.msra.mxu0 0.0
        %696 = vmatprep.subr.mxu0 0.0
        %697 = vmatpush1.msra.mxu0 0.0
        %698 = vmatprep.subr.mxu0 0.0
        %699 = vmatpush1.msra.mxu0 0.0
        %700 = vmatprep.subr.mxu0 0.0
        %701 = vmatpush1.msra.mxu0 0.0
        %702 = vmatprep.subr.mxu0 0.0
        %703 = vmatpush1.msra.mxu0 0.0
        %704 = vmatprep.subr.mxu0 0.0
        %705 = vmatpush1.msra.mxu0 0.0
        %706 = vmatprep.subr.mxu0 0.0
        %707 = vmatpush1.msra.mxu0 0.0
        %708 = vmatprep.subr.mxu0 0.0
        %709 = vmatpush1.msra.mxu0 0.0
        %710 = vmatprep.subr.mxu0 0.0
        %711 = vmatpush1.msra.mxu0 0.0
        %712 = vmatprep.subr.mxu0 0.0
        %713 = vmatpush1.msra.mxu0 0.0
        %714 = vmatprep.subr.mxu0 0.0
        %715 = vmatpush1.msra.mxu0 0.0
        %716 = vmatprep.subr.mxu0 0.0
        %717 = vmatpush1.msra.mxu0 0.0
        %718 = vmatprep.subr.mxu0 0.0
        %719 = vmatpush1.msra.mxu0 0.0
        %720 = vmatprep.subr.mxu0 0.0
        %721 = vmatpush1.msra.mxu0 0.0
        %722 = vmatprep.subr.mxu0 0.0
        %723 = vmatpush1.msra.mxu0 0.0
        %724 = vmatprep.subr.mxu0 0.0
        %725 = vmatpush1.msra.mxu0 0.0
        %726 = vmatprep.subr.mxu0 0.0
        %727 = vmatpush1.msra.mxu0 0.0
        %728 = vmatprep.subr.mxu0 0.0
        %729 = vmatpush1.msra.mxu0 0.0
        %730 = vmatprep.subr.mxu0 0.0
        %731 = vmatpush1.msra.mxu0 0.0
        %732 = vmatprep.mubr.f32.mxu0 0.0
        %733 = vmatmul.mubr.f32.gmra.mrb[0].mxu0 %v666
        %v734 = vpop.f32.mrb[0].mxu0
        %v735 = vadd.f32 0.0, %v734
        %v736 = vpop.f32.mrb[0].mxu0
        %737 = vdwg.mxu0
        %v738 = vld [vmem:[%s2] sm:$0xff]
        %v739 = vld [vmem:[%s2 + $0x8] sm:$0xff]
        %v740 = vld [vmem:[%s2 + $0x10] sm:$0xff]
        %v741 = vld [vmem:[%s2 + $0x18] sm:$0xff]
        %v742 = vpack.c.bf16 %v735, %v735
        %v743 = vpack.c.bf16 %v739, %v738
        %v744 = vpack.c.bf16 %v741, %v740
        %v745 = vld [vmem:[%s3] sm:$0x1]
        %v747 = vlaneseq
        %v748 = vshrl.u32 %v747, 7
        %v749 = vsub.s32 0, %v748
        %v750 = vrot.slane %v745, %v749
        %v753 = vsel %vm664, %v742, 0
        %755 = vmatprep.subr.bf16.mxu0 0
        %756 = vmatpush1.bf16.msra.mxu0 %v743
        %757 = vmatprep.subr.bf16.mxu0 0
        %758 = vmatpush1.bf16.msra.mxu0 %v744
        %759 = vmatprep.subr.bf16.mxu0 0
        %760 = vmatpush1.bf16.msra.mxu0 0
        %761 = vmatprep.subr.bf16.mxu0 0
        %762 = vmatpush1.bf16.msra.mxu0 0
        %763 = vmatprep.subr.bf16.mxu0 0
        %764 = vmatpush1.bf16.msra.mxu0 0
        %765 = vmatprep.subr.bf16.mxu0 0
        %766 = vmatpush1.bf16.msra.mxu0 0
        %767 = vmatprep.subr.bf16.mxu0 0
        %768 = vmatpush1.bf16.msra.mxu0 0
        %769 = vmatprep.subr.bf16.mxu0 0
        %770 = vmatpush1.bf16.msra.mxu0 0
        %771 = vmatprep.subr.bf16.mxu0 0
        %772 = vmatpush1.bf16.msra.mxu0 0
        %773 = vmatprep.subr.bf16.mxu0 0
        %774 = vmatpush1.bf16.msra.mxu0 0
        %775 = vmatprep.subr.bf16.mxu0 0
        %776 = vmatpush1.bf16.msra.mxu0 0
        %777 = vmatprep.subr.bf16.mxu0 0
        %778 = vmatpush1.bf16.msra.mxu0 0
        %779 = vmatprep.subr.bf16.mxu0 0
        %780 = vmatpush1.bf16.msra.mxu0 0
        %781 = vmatprep.subr.bf16.mxu0 0
        %782 = vmatpush1.bf16.msra.mxu0 0
        %783 = vmatprep.subr.bf16.mxu0 0
        %784 = vmatpush1.bf16.msra.mxu0 0
        %785 = vmatprep.subr.bf16.mxu0 0
        %786 = vmatpush1.bf16.msra.mxu0 0
        %787 = vmatprep.mubr.bf16.mxu0 0
        %788 = vmatmul.mubr.bf16.gmra.mrb[0].mxu0 %v753
        %v789 = vpop.f32.mrb[0].mxu0
        %v790 = vadd.f32 %v750, %v789
        %v791 = vpop.f32.mrb[0].mxu0
        %v792 = vpop.f32.mrb[0].mxu0
        %v793 = vpop.f32.mrb[0].mxu0
        %794 = vdwg.mxu0
        %vm795 = vcmask 785408
        %796 = vst.msk [vmem:[#allocation2] sm:$0xff] %vm795, %v790
        %v797 = vmax.f32 %v735, 0.0
        %v798 = vld [vmem:[%s4] sm:$0xff]
        %v799 = vld [vmem:[%s4 + $0x8] sm:$0xff]
        %v800 = vld [vmem:[%s4 + $0x10] sm:$0xff]
        %v801 = vld [vmem:[%s4 + $0x18] sm:$0xff]
        %v803 = vsel %vm664, %v797, 0
        %805 = vmatprep.subr.mxu0 0.0
        %806 = vmatpush1.msra.mxu0 %v798
        %807 = vmatprep.subr.mxu0 0.0
        %808 = vmatpush1.msra.mxu0 %v799
        %809 = vmatprep.subr.mxu0 0.0
        %810 = vmatpush1.msra.mxu0 %v800
        %811 = vmatprep.subr.mxu0 0.0
        %812 = vmatpush1.msra.mxu0 %v801
        %813 = vmatprep.subr.mxu0 0.0
        %814 = vmatpush1.msra.mxu0 0.0
        %815 = vmatprep.subr.mxu0 0.0
        %816 = vmatpush1.msra.mxu0 0.0
        %817 = vmatprep.subr.mxu0 0.0
        %818 = vmatpush1.msra.mxu0 0.0
        %819 = vmatprep.subr.mxu0 0.0
        %820 = vmatpush1.msra.mxu0 0.0
        %821 = vmatprep.subr.mxu0 0.0
        %822 = vmatpush1.msra.mxu0 0.0
        %823 = vmatprep.subr.mxu0 0.0
        %824 = vmatpush1.msra.mxu0 0.0
        %825 = vmatprep.subr.mxu0 0.0
        %826 = vmatpush1.msra.mxu0 0.0
        %827 = vmatprep.subr.mxu0 0.0
        %828 = vmatpush1.msra.mxu0 0.0
        %829 = vmatprep.subr.mxu0 0.0
        %830 = vmatpush1.msra.mxu0 0.0
        %831 = vmatprep.subr.mxu0 0.0
        %832 = vmatpush1.msra.mxu0 0.0
        %833 = vmatprep.subr.mxu0 0.0
        %834 = vmatpush1.msra.mxu0 0.0
        %835 = vmatprep.subr.mxu0 0.0
        %836 = vmatpush1.msra.mxu0 0.0
        %837 = vmatprep.subr.mxu0 0.0
        %838 = vmatpush1.msra.mxu0 0.0
        %839 = vmatprep.subr.mxu0 0.0
        %840 = vmatpush1.msra.mxu0 0.0
        %841 = vmatprep.subr.mxu0 0.0
        %842 = vmatpush1.msra.mxu0 0.0
        %843 = vmatprep.subr.mxu0 0.0
        %844 = vmatpush1.msra.mxu0 0.0
        %845 = vmatprep.subr.mxu0 0.0
        %846 = vmatpush1.msra.mxu0 0.0
        %847 = vmatprep.subr.mxu0 0.0
        %848 = vmatpush1.msra.mxu0 0.0
        %849 = vmatprep.subr.mxu0 0.0
        %850 = vmatpush1.msra.mxu0 0.0
        %851 = vmatprep.subr.mxu0 0.0
        %852 = vmatpush1.msra.mxu0 0.0
        %853 = vmatprep.subr.mxu0 0.0
        %854 = vmatpush1.msra.mxu0 0.0
        %855 = vmatprep.subr.mxu0 0.0
        %856 = vmatpush1.msra.mxu0 0.0
        %857 = vmatprep.subr.mxu0 0.0
        %858 = vmatpush1.msra.mxu0 0.0
        %859 = vmatprep.subr.mxu0 0.0
        %860 = vmatpush1.msra.mxu0 0.0
        %861 = vmatprep.subr.mxu0 0.0
        %862 = vmatpush1.msra.mxu0 0.0
        %863 = vmatprep.subr.mxu0 0.0
        %864 = vmatpush1.msra.mxu0 0.0
        %865 = vmatprep.subr.mxu0 0.0
        %866 = vmatpush1.msra.mxu0 0.0
        %867 = vmatprep.subr.mxu0 0.0
        %868 = vmatpush1.msra.mxu0 0.0
        %869 = vmatprep.mubr.f32.mxu0 0.0
        %870 = vmatmul.mubr.f32.gmra.mrb[0].mxu0 %v803
        %v871 = vpop.f32.mrb[0].mxu0
        %v872 = vadd.f32 0.0, %v871
        %v873 = vpop.f32.mrb[0].mxu0
        %874 = vdwg.mxu0
        %v875 = vld [vmem:[%s5] sm:$0x1]
        %v877 = vlaneseq
        %v878 = vshrl.u32 %v877, 7
        %v879 = vsub.s32 0, %v878
        %v880 = vrot.slane %v875, %v879
        %v882 = vmul.f32 %v872, %v880
        %vm883 = vcmask 130048
        %v884 = vsel %vm883, %v882, 0.0
        %885 = vadd.xlane.f32.xlu0 %v884
        %v886 = vpop.xlane.xlu0 %885
        %v887 = vld [vmem:[#allocation5] sm:$0x1]
        %v889 = vlaneseq
        %v890 = vshrl.u32 %v889, 7
        %v891 = vsub.s32 0, %v890
        %v892 = vrot.slane %v887, %v891
        %v894 = vadd.f32 %v886, %v892
        %v895 = vsub.f32 0.0, %v894
        %v896 = vmul.f32 %v895, 1.442695
        %v897 = vpow.pop %v896
        %v898 = vadd.f32 %v897, 1.0
        %v899 = vrcp.pop %v898
        %v900 = vmul.f32 8.0, %v899
        %vm901 = vcmask 7168
        %902 = vst.msk [vmem:[#allocation3] sm:$0xff] %vm901, %v900
        %v903 = vlaneseq
        %v904 = vshrl.u32 %v903, 7
        %v905 = vstv 0
        %v906 = vadd.s32 %v904, %v905
        %v907 = vcvt.s32.f32 %v906
        %v908 = vlaneseq
        %v909 = vand.u32 %v908, 127
        %v910 = vcvt.s32.f32 %v909
        %vm911 = vcmp.lt.f32.partialorder %v910, %v907
        %v912 = vsub.f32 %v910, %v907
        %v913 = vsel %vm911, 1e+18, %v912
        %v914 = vld [vmem:[#allocation3] sm:$0xff]
        %v915 = vld [vmem:[#allocation2] sm:$0xff]
        %v916 = vld [vmem:[#allocation2] sm:$0xff]
        %v917 = vpack.c.bf16 %v915, %v915
        %v918 = vpack.c.bf16 %v916, %v916
        %920 = vrot.lane.b32.xlu0 %v918, 96
        %v921 = vpop.permute.xlu0 %920
        %v923 = vsel %vm883, %v917, 0
        %v926 = vsel %vm883, %v921, 0
        %928 = vmatprep.subr.bf16.mxu0 0
        %929 = vmatpush1.bf16.xpose.msra.mxu0 %v926
        %930 = vmatprep.subr.bf16.mxu0 0
        %931 = vmatpush1.bf16.xpose.msra.mxu0 0
        %932 = vmatprep.subr.bf16.mxu0 0
        %933 = vmatpush1.bf16.xpose.msra.mxu0 0
        %934 = vmatprep.subr.bf16.mxu0 0
        %935 = vmatpush1.bf16.xpose.msra.mxu0 0
        %936 = vmatprep.subr.bf16.mxu0 0
        %937 = vmatpush1.bf16.xpose.msra.mxu0 0
        %938 = vmatprep.subr.bf16.mxu0 0
        %939 = vmatpush1.bf16.xpose.msra.mxu0 0
        %940 = vmatprep.subr.bf16.mxu0 0
        %941 = vmatpush1.bf16.xpose.msra.mxu0 0
        %942 = vmatprep.subr.bf16.mxu0 0
        %943 = vmatpush1.bf16.xpose.msra.mxu0 0
        %944 = vmatprep.subr.bf16.mxu0 0
        %945 = vmatpush1.bf16.xpose.msra.mxu0 0
        %946 = vmatprep.subr.bf16.mxu0 0
        %947 = vmatpush1.bf16.xpose.msra.mxu0 0
        %948 = vmatprep.subr.bf16.mxu0 0
        %949 = vmatpush1.bf16.xpose.msra.mxu0 0
        %950 = vmatprep.subr.bf16.mxu0 0
        %951 = vmatpush1.bf16.xpose.msra.mxu0 0
        %952 = vmatprep.subr.bf16.mxu0 0
        %953 = vmatpush1.bf16.xpose.msra.mxu0 0
        %954 = vmatprep.subr.bf16.mxu0 0
        %955 = vmatpush1.bf16.xpose.msra.mxu0 0
        %956 = vmatprep.subr.bf16.mxu0 0
        %957 = vmatpush1.bf16.xpose.msra.mxu0 0
        %958 = vmatprep.subr.bf16.mxu0 0
        %959 = vmatpush1.bf16.xpose.msra.mxu0 0
        %960 = vmatprep.mubr.bf16.mxu0 0
        %961 = vmatmul.mubr.bf16.gmra.mrb[0].mxu0 %v923
        %v962 = vpop.f32.mrb[0].mxu0
        %v963 = vadd.f32 0.0, %v962
        %v964 = vpop.f32.mrb[0].mxu0
        %v965 = vpop.f32.mrb[0].mxu0
        %v966 = vpop.f32.mrb[0].mxu0
        %967 = vdwg.mxu0
        %v968 = vmul.f32 %v963, 0.70710677
        %v969 = vadd.f32 %v914, 2.0
        %971 = vset.pattern.permute.xlu0 0
        %972 = vperm.xlu0 %971, %v969
        %v973 = vpop.permute.xlu0 %972
        %vm975 = vcmp.gt.f32.partialorder %v913, %v973
        %v976 = vsel %vm975, -1e+30, %v968
        %vm977 = vcmask 64512
        %v978 = vsel %vm977, %v976, -inf
        %979 = vmax.xlane.f32.xlu0 %v978
        %v980 = vpop.xlane.xlu0 %979
        %v981 = vsub.f32 %v976, %v980
        %v982 = vmul.f32 %v981, 1.442695
        %v983 = vpow.pop %v982
        %v984 = vsel %vm977, %v983, 0.0
        %985 = vadd.xlane.f32.xlu0 %v984
        %v986 = vpop.xlane.xlu0 %985
        %v987 = vrcp.pop %v986
        %v988 = vmul.f32 %v983, %v987
        %v989 = vpack.c.bf16 %v988, %v988
        %990 = vrot.lane.b32.xlu0 %v918, 64
        %v991 = vpop.permute.xlu0 %990
        %v993 = vsel %vm977, %v989, 0
        %vm995 = vcmask 1043456
        %v997 = vsel %vm995, %v991, 0
        %999 = vmatprep.subr.bf16.mxu0 0
        %1000 = vmatpush1.bf16.msra.mxu0 %v997
        %1001 = vmatprep.subr.bf16.mxu0 0
        %1002 = vmatpush1.bf16.msra.mxu0 0
        %1003 = vmatprep.subr.bf16.mxu0 0
        %1004 = vmatpush1.bf16.msra.mxu0 0
        %1005 = vmatprep.subr.bf16.mxu0 0
        %1006 = vmatpush1.bf16.msra.mxu0 0
        %1007 = vmatprep.subr.bf16.mxu0 0
        %1008 = vmatpush1.bf16.msra.mxu0 0
        %1009 = vmatprep.subr.bf16.mxu0 0
        %1010 = vmatpush1.bf16.msra.mxu0 0
        %1011 = vmatprep.subr.bf16.mxu0 0
        %1012 = vmatpush1.bf16.msra.mxu0 0
        %1013 = vmatprep.subr.bf16.mxu0 0
        %1014 = vmatpush1.bf16.msra.mxu0 0
        %1015 = vmatprep.subr.bf16.mxu0 0
        %1016 = vmatpush1.bf16.msra.mxu0 0
        %1017 = vmatprep.subr.bf16.mxu0 0
        %1018 = vmatpush1.bf16.msra.mxu0 0
        %1019 = vmatprep.subr.bf16.mxu0 0
        %1020 = vmatpush1.bf16.msra.mxu0 0
        %1021 = vmatprep.subr.bf16.mxu0 0
        %1022 = vmatpush1.bf16.msra.mxu0 0
        %1023 = vmatprep.subr.bf16.mxu0 0
        %1024 = vmatpush1.bf16.msra.mxu0 0
        %1025 = vmatprep.subr.bf16.mxu0 0
        %1026 = vmatpush1.bf16.msra.mxu0 0
        %1027 = vmatprep.subr.bf16.mxu0 0
        %1028 = vmatpush1.bf16.msra.mxu0 0
        %1029 = vmatprep.subr.bf16.mxu0 0
        %1030 = vmatpush1.bf16.msra.mxu0 0
        %1031 = vmatprep.mubr.bf16.mxu0 0
        %1032 = vmatmul.mubr.bf16.gmra.mrb[0].mxu0 %v993
        %v1033 = vpop.f32.mrb[0].mxu0
        %v1034 = vadd.f32 0.0, %v1033
        %v1035 = vpop.f32.mrb[0].mxu0
        %v1036 = vpop.f32.mrb[0].mxu0
        %v1037 = vpop.f32.mrb[0].mxu0
        %1038 = vdwg.mxu0
        %1039 = vst.msk [vmem:[#allocation4] sm:$0xff] %vm883, %v1034
        %v1040 = vld [vmem:[#allocation2] sm:$0xff]
        %v1041 = vld [vmem:[#allocation2] sm:$0xff]
        %v1042 = vpack.c.bf16 %v1040, %v1040
        %v1043 = vpack.c.bf16 %v1041, %v1041
        %1045 = vrot.lane.b32.xlu0 %v1042, 112
        %v1046 = vpop.permute.xlu0 %1045
        %1048 = vrot.lane.b32.xlu0 %v1043, 80
        %v1049 = vpop.permute.xlu0 %1048
        %v1051 = vsel %vm883, %v1046, 0
        %v1054 = vsel %vm883, %v1049, 0
        %1056 = vmatprep.subr.bf16.mxu0 0
        %1057 = vmatpush1.bf16.xpose.msra.mxu0 %v1054
        %1058 = vmatprep.subr.bf16.mxu0 0
        %1059 = vmatpush1.bf16.xpose.msra.mxu0 0
        %1060 = vmatprep.subr.bf16.mxu0 0
        %1061 = vmatpush1.bf16.xpose.msra.mxu0 0
        %1062 = vmatprep.subr.bf16.mxu0 0
        %1063 = vmatpush1.bf16.xpose.msra.mxu0 0
        %1064 = vmatprep.subr.bf16.mxu0 0
        %1065 = vmatpush1.bf16.xpose.msra.mxu0 0
        %1066 = vmatprep.subr.bf16.mxu0 0
        %1067 = vmatpush1.bf16.xpose.msra.mxu0 0
        %1068 = vmatprep.subr.bf16.mxu0 0
        %1069 = vmatpush1.bf16.xpose.msra.mxu0 0
        %1070 = vmatprep.subr.bf16.mxu0 0
        %1071 = vmatpush1.bf16.xpose.msra.mxu0 0
        %1072 = vmatprep.subr.bf16.mxu0 0
        %1073 = vmatpush1.bf16.xpose.msra.mxu0 0
        %1074 = vmatprep.subr.bf16.mxu0 0
        %1075 = vmatpush1.bf16.xpose.msra.mxu0 0
        %1076 = vmatprep.subr.bf16.mxu0 0
        %1077 = vmatpush1.bf16.xpose.msra.mxu0 0
        %1078 = vmatprep.subr.bf16.mxu0 0
        %1079 = vmatpush1.bf16.xpose.msra.mxu0 0
        %1080 = vmatprep.subr.bf16.mxu0 0
        %1081 = vmatpush1.bf16.xpose.msra.mxu0 0
        %1082 = vmatprep.subr.bf16.mxu0 0
        %1083 = vmatpush1.bf16.xpose.msra.mxu0 0
        %1084 = vmatprep.subr.bf16.mxu0 0
        %1085 = vmatpush1.bf16.xpose.msra.mxu0 0
        %1086 = vmatprep.subr.bf16.mxu0 0
        %1087 = vmatpush1.bf16.xpose.msra.mxu0 0
        %1088 = vmatprep.mubr.bf16.mxu0 0
        %1089 = vmatmul.mubr.bf16.gmra.mrb[0].mxu0 %v1051
        %v1090 = vpop.f32.mrb[0].mxu0
        %v1091 = vadd.f32 0.0, %v1090
        %v1092 = vpop.f32.mrb[0].mxu0
        %v1093 = vpop.f32.mrb[0].mxu0
        %v1094 = vpop.f32.mrb[0].mxu0
        %1095 = vdwg.mxu0
        %v1096 = vmul.f32 %v1091, 0.70710677
        %v1097 = vadd.f32 %v914, 4.0
        %1099 = vset.pattern.permute.xlu0 0
        %1100 = vperm.xlu0 %1099, %v1097
        %v1101 = vpop.permute.xlu0 %1100
        %vm1103 = vcmp.gt.f32.partialorder %v913, %v1101
        %v1104 = vsel %vm1103, -1e+30, %v1096
        %v1105 = vsel %vm977, %v1104, -inf
        %1106 = vmax.xlane.f32.xlu0 %v1105
        %v1107 = vpop.xlane.xlu0 %1106
        %v1108 = vsub.f32 %v1104, %v1107
        %v1109 = vmul.f32 %v1108, 1.442695
        %v1110 = vpow.pop %v1109
        %v1111 = vsel %vm977, %v1110, 0.0
        %1112 = vadd.xlane.f32.xlu0 %v1111
        %v1113 = vpop.xlane.xlu0 %1112
        %v1114 = vrcp.pop %v1113
        %v1115 = vmul.f32 %v1110, %v1114
        %v1116 = vpack.c.bf16 %v1115, %v1115
        %1117 = vrot.lane.b32.xlu0 %v1043, 48
        %v1118 = vpop.permute.xlu0 %1117
        %v1120 = vsel %vm977, %v1116, 0
        %v1123 = vsel %vm995, %v1118, 0
        %1125 = vmatprep.subr.bf16.mxu0 0
        %1126 = vmatpush1.bf16.msra.mxu0 %v1123
        %1127 = vmatprep.subr.bf16.mxu0 0
        %1128 = vmatpush1.bf16.msra.mxu0 0
        %1129 = vmatprep.subr.bf16.mxu0 0
        %1130 = vmatpush1.bf16.msra.mxu0 0
        %1131 = vmatprep.subr.bf16.mxu0 0
        %1132 = vmatpush1.bf16.msra.mxu0 0
        %1133 = vmatprep.subr.bf16.mxu0 0
        %1134 = vmatpush1.bf16.msra.mxu0 0
        %1135 = vmatprep.subr.bf16.mxu0 0
        %1136 = vmatpush1.bf16.msra.mxu0 0
        %1137 = vmatprep.subr.bf16.mxu0 0
        %1138 = vmatpush1.bf16.msra.mxu0 0
        %1139 = vmatprep.subr.bf16.mxu0 0
        %1140 = vmatpush1.bf16.msra.mxu0 0
        %1141 = vmatprep.subr.bf16.mxu0 0
        %1142 = vmatpush1.bf16.msra.mxu0 0
        %1143 = vmatprep.subr.bf16.mxu0 0
        %1144 = vmatpush1.bf16.msra.mxu0 0
        %1145 = vmatprep.subr.bf16.mxu0 0
        %1146 = vmatpush1.bf16.msra.mxu0 0
        %1147 = vmatprep.subr.bf16.mxu0 0
        %1148 = vmatpush1.bf16.msra.mxu0 0
        %1149 = vmatprep.subr.bf16.mxu0 0
        %1150 = vmatpush1.bf16.msra.mxu0 0
        %1151 = vmatprep.subr.bf16.mxu0 0
        %1152 = vmatpush1.bf16.msra.mxu0 0
        %1153 = vmatprep.subr.bf16.mxu0 0
        %1154 = vmatpush1.bf16.msra.mxu0 0
        %1155 = vmatprep.subr.bf16.mxu0 0
        %1156 = vmatpush1.bf16.msra.mxu0 0
        %1157 = vmatprep.mubr.bf16.mxu0 0
        %1158 = vmatmul.mubr.bf16.gmra.mrb[0].mxu0 %v1120
        %v1159 = vpop.f32.mrb[0].mxu0
        %v1160 = vadd.f32 0.0, %v1159
        %v1161 = vpop.f32.mrb[0].mxu0
        %v1162 = vpop.f32.mrb[0].mxu0
        %v1163 = vpop.f32.mrb[0].mxu0
        %1164 = vdwg.mxu0
        %1166 = vrot.lane.b32.xlu0 %v1160, 16
        %v1167 = vpop.permute.xlu0 %1166
        %vm1169 = vcmask 261248
        %1170 = vst.msk [vmem:[#allocation4] sm:$0xff] %vm1169, %v1167
        %v1171 = vld [vmem:[#allocation4] sm:$0xff]
        %v1172 = vld [vmem:[#allocation9] sm:$0xff]
        %v1173 = vld [vmem:[#allocation9 + $0x8] sm:$0xff]
        %v1174 = vld [vmem:[#allocation9 + $0x10] sm:$0xff]
        %v1175 = vld [vmem:[#allocation9 + $0x18] sm:$0xff]
        %v1176 = vpack.c.bf16 %v1171, %v1171
        %v1177 = vpack.c.bf16 %v1173, %v1172
        %v1178 = vpack.c.bf16 %v1175, %v1174
        %v1180 = vsel %vm664, %v1176, 0
        %1182 = vmatprep.subr.bf16.mxu0 0
        %1183 = vmatpush1.bf16.msra.mxu0 %v1177
        %1184 = vmatprep.subr.bf16.mxu0 0
        %1185 = vmatpush1.bf16.msra.mxu0 %v1178
        %1186 = vmatprep.subr.bf16.mxu0 0
        %1187 = vmatpush1.bf16.msra.mxu0 0
        %1188 = vmatprep.subr.bf16.mxu0 0
        %1189 = vmatpush1.bf16.msra.mxu0 0
        %1190 = vmatprep.subr.bf16.mxu0 0
        %1191 = vmatpush1.bf16.msra.mxu0 0
        %1192 = vmatprep.subr.bf16.mxu0 0
        %1193 = vmatpush1.bf16.msra.mxu0 0
        %1194 = vmatprep.subr.bf16.mxu0 0
        %1195 = vmatpush1.bf16.msra.mxu0 0
        %1196 = vmatprep.subr.bf16.mxu0 0
        %1197 = vmatpush1.bf16.msra.mxu0 0
        %1198 = vmatprep.subr.bf16.mxu0 0
        %1199 = vmatpush1.bf16.msra.mxu0 0
        %1200 = vmatprep.subr.bf16.mxu0 0
        %1201 = vmatpush1.bf16.msra.mxu0 0
        %1202 = vmatprep.subr.bf16.mxu0 0
        %1203 = vmatpush1.bf16.msra.mxu0 0
        %1204 = vmatprep.subr.bf16.mxu0 0
        %1205 = vmatpush1.bf16.msra.mxu0 0
        %1206 = vmatprep.subr.bf16.mxu0 0
        %1207 = vmatpush1.bf16.msra.mxu0 0
        %1208 = vmatprep.subr.bf16.mxu0 0
        %1209 = vmatpush1.bf16.msra.mxu0 0
        %1210 = vmatprep.subr.bf16.mxu0 0
        %1211 = vmatpush1.bf16.msra.mxu0 0
        %1212 = vmatprep.subr.bf16.mxu0 0
        %1213 = vmatpush1.bf16.msra.mxu0 0
        %1214 = vmatprep.mubr.bf16.mxu0 0
        %1215 = vmatmul.mubr.bf16.gmra.mrb[0].mxu0 %v1180
        %v1216 = vpop.f32.mrb[0].mxu0
        %v1217 = vadd.f32 0.0, %v1216
        %v1218 = vpop.f32.mrb[0].mxu0
        %v1219 = vpop.f32.mrb[0].mxu0
        %v1220 = vpop.f32.mrb[0].mxu0
        %1221 = vdwg.mxu0
        %v1222 = vadd.f32 %v659, %v1217
        %v1223 = vsel %vm664, %v1222, 0.0
        %1224 = vadd.xlane.f32.xlu0 %v1223
        %v1225 = vpop.xlane.xlu0 %1224
        %v1226 = vrcp.pop 32.0
        %v1227 = vmul.f32 %v1225, %v1226
        %v1228 = vsub.f32 %v1222, %v1227
        %v1229 = vmul.f32 %v1228, %v1228
        %v1230 = vsel %vm664, %v1229, 0.0
        %1231 = vadd.xlane.f32.xlu0 %v1230
        %v1232 = vpop.xlane.xlu0 %1231
        %v1233 = vmul.f32 %v1232, %v1226
        %v1234 = vadd.f32 %v1233, 1e-05
        %v1235 = vrsqrt.pop %v1234
        %v1236 = vmul.f32 %v1228, %v1235
        %v1237 = vld [vmem:[#allocation17] sm:$0x1]
        %v1239 = vlaneseq
        %v1240 = vshrl.u32 %v1239, 7
        %v1241 = vsub.s32 0, %v1240
        %v1242 = vrot.slane %v1237, %v1241
        %v1244 = vmul.f32 %v1236, %v1242
        %v1245 = vld [vmem:[#allocation18] sm:$0x1]
        %v1247 = vlaneseq
        %v1248 = vshrl.u32 %v1247, 7
        %v1249 = vsub.s32 0, %v1248
        %v1250 = vrot.slane %v1245, %v1249
        %v1252 = vadd.f32 %v1244, %v1250
        %v1253 = vld [vmem:[#allocation11] sm:$0xff]
        %v1254 = vld [vmem:[#allocation11 + $0x8] sm:$0xff]
        %v1255 = vld [vmem:[#allocation11 + $0x10] sm:$0xff]
        %v1256 = vld [vmem:[#allocation11 + $0x18] sm:$0xff]
        %v1257 = vpack.c.bf16 %v1252, %v1252
        %v1258 = vpack.c.bf16 %v1254, %v1253
        %v1259 = vpack.c.bf16 %v1256, %v1255
        %v1260 = vld [vmem:[#allocation12] sm:$0x1]
        %v1262 = vlaneseq
        %v1263 = vshrl.u32 %v1262, 7
        %v1264 = vsub.s32 0, %v1263
        %v1265 = vrot.slane %v1260, %v1264
        %v1268 = vsel %vm664, %v1257, 0
        %1270 = vmatprep.subr.bf16.mxu0 0
        %1271 = vmatpush1.bf16.msra.mxu0 %v1258
        %1272 = vmatprep.subr.bf16.mxu0 0
        %1273 = vmatpush1.bf16.msra.mxu0 %v1259
        %1274 = vmatprep.subr.bf16.mxu0 0
        %1275 = vmatpush1.bf16.msra.mxu0 0
        %1276 = vmatprep.subr.bf16.mxu0 0
        %1277 = vmatpush1.bf16.msra.mxu0 0
        %1278 = vmatprep.subr.bf16.mxu0 0
        %1279 = vmatpush1.bf16.msra.mxu0 0
        %1280 = vmatprep.subr.bf16.mxu0 0
        %1281 = vmatpush1.bf16.msra.mxu0 0
        %1282 = vmatprep.subr.bf16.mxu0 0
        %1283 = vmatpush1.bf16.msra.mxu0 0
        %1284 = vmatprep.subr.bf16.mxu0 0
        %1285 = vmatpush1.bf16.msra.mxu0 0
        %1286 = vmatprep.subr.bf16.mxu0 0
        %1287 = vmatpush1.bf16.msra.mxu0 0
        %1288 = vmatprep.subr.bf16.mxu0 0
        %1289 = vmatpush1.bf16.msra.mxu0 0
        %1290 = vmatprep.subr.bf16.mxu0 0
        %1291 = vmatpush1.bf16.msra.mxu0 0
        %1292 = vmatprep.subr.bf16.mxu0 0
        %1293 = vmatpush1.bf16.msra.mxu0 0
        %1294 = vmatprep.subr.bf16.mxu0 0
        %1295 = vmatpush1.bf16.msra.mxu0 0
        %1296 = vmatprep.subr.bf16.mxu0 0
        %1297 = vmatpush1.bf16.msra.mxu0 0
        %1298 = vmatprep.subr.bf16.mxu0 0
        %1299 = vmatpush1.bf16.msra.mxu0 0
        %1300 = vmatprep.subr.bf16.mxu0 0
        %1301 = vmatpush1.bf16.msra.mxu0 0
        %1302 = vmatprep.mubr.bf16.mxu0 0
        %1303 = vmatmul.mubr.bf16.gmra.mrb[0].mxu0 %v1268
        %v1304 = vpop.f32.mrb[0].mxu0
        %v1305 = vadd.f32 %v1265, %v1304
        %v1306 = vpop.f32.mrb[0].mxu0
        %v1307 = vpop.f32.mrb[0].mxu0
        %v1308 = vpop.f32.mrb[0].mxu0
        %1309 = vdwg.mxu0
        %v1310 = vmax.f32 %v1305, 0.0
        %v1311 = vld [vmem:[#allocation14] sm:$0xff]
        %v1312 = vld [vmem:[#allocation14 + $0x8] sm:$0xff]
        %v1313 = vld [vmem:[#allocation14 + $0x10] sm:$0xff]
        %v1314 = vld [vmem:[#allocation14 + $0x18] sm:$0xff]
        %v1315 = vpack.c.bf16 %v1310, %v1310
        %v1316 = vpack.c.bf16 %v1312, %v1311
        %v1317 = vpack.c.bf16 %v1314, %v1313
        %v1318 = vld [vmem:[#allocation15] sm:$0x1]
        %v1320 = vlaneseq
        %v1321 = vshrl.u32 %v1320, 7
        %v1322 = vsub.s32 0, %v1321
        %v1323 = vrot.slane %v1318, %v1322
        %v1326 = vsel %vm664, %v1315, 0
        %1328 = vmatprep.subr.bf16.mxu0 0
        %1329 = vmatpush1.bf16.msra.mxu0 %v1316
        %1330 = vmatprep.subr.bf16.mxu0 0
        %1331 = vmatpush1.bf16.msra.mxu0 %v1317
        %1332 = vmatprep.subr.bf16.mxu0 0
        %1333 = vmatpush1.bf16.msra.mxu0 0
        %1334 = vmatprep.subr.bf16.mxu0 0
        %1335 = vmatpush1.bf16.msra.mxu0 0
        %1336 = vmatprep.subr.bf16.mxu0 0
        %1337 = vmatpush1.bf16.msra.mxu0 0
        %1338 = vmatprep.subr.bf16.mxu0 0
        %1339 = vmatpush1.bf16.msra.mxu0 0
        %1340 = vmatprep.subr.bf16.mxu0 0
        %1341 = vmatpush1.bf16.msra.mxu0 0
        %1342 = vmatprep.subr.bf16.mxu0 0
        %1343 = vmatpush1.bf16.msra.mxu0 0
        %1344 = vmatprep.subr.bf16.mxu0 0
        %1345 = vmatpush1.bf16.msra.mxu0 0
        %1346 = vmatprep.subr.bf16.mxu0 0
        %1347 = vmatpush1.bf16.msra.mxu0 0
        %1348 = vmatprep.subr.bf16.mxu0 0
        %1349 = vmatpush1.bf16.msra.mxu0 0
        %1350 = vmatprep.subr.bf16.mxu0 0
        %1351 = vmatpush1.bf16.msra.mxu0 0
        %1352 = vmatprep.subr.bf16.mxu0 0
        %1353 = vmatpush1.bf16.msra.mxu0 0
        %1354 = vmatprep.subr.bf16.mxu0 0
        %1355 = vmatpush1.bf16.msra.mxu0 0
        %1356 = vmatprep.subr.bf16.mxu0 0
        %1357 = vmatpush1.bf16.msra.mxu0 0
        %1358 = vmatprep.subr.bf16.mxu0 0
        %1359 = vmatpush1.bf16.msra.mxu0 0
        %1360 = vmatprep.mubr.bf16.mxu0 0
        %1361 = vmatmul.mubr.bf16.gmra.mrb[0].mxu0 %v1326
        %v1362 = vpop.f32.mrb[0].mxu0
        %v1363 = vadd.f32 %v1323, %v1362
        %v1364 = vpop.f32.mrb[0].mxu0
        %v1365 = vpop.f32.mrb[0].mxu0
        %v1366 = vpop.f32.mrb[0].mxu0
        %1367 = vdwg.mxu0
        %v1368 = vadd.f32 %v1252, %v1363
        %v1369 = vsel %vm664, %v1368, 0.0
        %1370 = vadd.xlane.f32.xlu0 %v1369
        %v1371 = vpop.xlane.xlu0 %1370
        %v1372 = vmul.f32 %v1371, %v1226
        %v1373 = vsub.f32 %v1368, %v1372
        %v1374 = vmul.f32 %v1373, %v1373
        %v1375 = vsel %vm664, %v1374, 0.0
        %1376 = vadd.xlane.f32.xlu0 %v1375
        %v1377 = vpop.xlane.xlu0 %1376
        %v1378 = vmul.f32 %v1377, %v1226
        %v1379 = vadd.f32 %v1378, 1e-05
        %v1380 = vrsqrt.pop %v1379
        %v1381 = vmul.f32 %v1373, %v1380
        %v1382 = vld [vmem:[#allocation20] sm:$0x1]
        %v1384 = vlaneseq
        %v1385 = vshrl.u32 %v1384, 7
        %v1386 = vsub.s32 0, %v1385
        %v1387 = vrot.slane %v1382, %v1386
        %v1389 = vmul.f32 %v1381, %v1387
        %v1390 = vld [vmem:[#allocation21] sm:$0x1]
        %v1392 = vlaneseq
        %v1393 = vshrl.u32 %v1392, 7
        %v1394 = vsub.s32 0, %v1393
        %v1395 = vrot.slane %v1390, %v1394
        %v1397 = vadd.f32 %v1389, %v1395
        %1398 = vst.msk [vmem:[%s657] sm:$0xff] %vm664, %v1397
        %s1399 = sand.u32 %s389, 1
        %s1400 = scalar_lea.sflag [#allocation8], %s1399
        %s1401 = sand.u32 %s389, 1
        %s1402 = smul.addr %s1401, 8
        %s1403 = scalar_lea.vmem [#allocation23], %s1402
        // Predicated region
        $region125: #{encoder_layer_forward.1} parent=83 // pred_check
          %p1404 = pneg %p399
        $region126: #{encoder_layer_forward.1} parent=83 // pred_check_branch
          %1406 = sbr.rel (%p1404) target = $region128
        $region127: #{encoder_layer_forward.1} parent=83 // pred_region
          %s1408 = ssub.s32 128, 128
          %1409 = vsyncadd %s1400, %s1408
          %s1410 = smul.addr %s40, 128
          %s1411 = scalar_lea.hbm %s16, %s1410
          %s1413 = sshll.u32 %s1403, 4
          %s1414 = int_to_ptr.vmem [resolvable:$true] %s1413
          %1416 = dma.vmem_to_hbm [thread:$0]  %s1414, 128, %s1411, %s1400
        $region128: #{encoder_layer_forward.1} parent=83 // pred_fallthru
          _
      $region84: #{encoder_layer_forward.1} parent=5 // pred_fallthru
        _
      %p1417 = scmp.le.s32.totalorder 2, %s35
      // Predicated region
      $region129: #{encoder_layer_forward.1} parent=5 // pred_check
        %p1418 = pneg %p1417
      $region130: #{encoder_layer_forward.1} parent=5 // pred_check_branch
        %1420 = sbr.rel (%p1418) target = $region132
      $region131: #{encoder_layer_forward.1} parent=5 // pred_region
        %s1421 = ssub.s32 %s35, 2
        // Predicated region
        $region133: #{encoder_layer_forward.1} parent=131 // pred_check
          %p1422 = pneg %p405
        $region134: #{encoder_layer_forward.1} parent=131 // pred_check_branch
          %1424 = sbr.rel (%p1422) target = $region136
        $region135: #{encoder_layer_forward.1} parent=131 // pred_region
          %s1425 = sand.u32 %s390, 1
          %s1426 = scalar_lea.sflag [#allocation8], %s1425
          %s1427 = sand.u32 %s390, 1
          %s1428 = smul.addr %s1427, 8
          %s1429 = scalar_lea.vmem [#allocation23], %s1428
          %1430 = dma.done %s1426, 128
        $region136: #{encoder_layer_forward.1} parent=131 // pred_fallthru
          _
      $region132: #{encoder_layer_forward.1} parent=5 // pred_fallthru
        _
    $region6: #{encoder_layer_forward.1} parent=1 // loop_footer
      %s39 = sadd.s32 1, %s35
    $region7: #{encoder_layer_forward.1} parent=1 // loop_footer_branch
      %34 = sbr.rel target = $region3
    $region8: #{encoder_layer_forward.1} parent=1 // loop_exit
      _
    %1431 = vsyncpa [#allocation7], 1
    %s1432 = scalar_lea.sflag [#allocation7], 1
    %1433 = vsyncpa %s1432, 1
    %1434 = vsyncpa [#allocation10], 1
    %1435 = vsyncpa [#allocation13], 1
    %1436 = vsyncpa [#allocation16], 1
    %1437 = vsyncpa [#allocation19], 1
    %1438 = vsyncpa [#allocation22], 1
    %1439 = vsyncpa [#allocation8], 1
    %s1440 = scalar_lea.sflag [#allocation8], 1
    %1441 = vsyncpa %s1440, 1

</llo_original>
